<compile_context>
chip_gen: v7x
topology: tpu7x:2x2x1
jax: 0.10.0
libtpu: 0.0.40
codegen_flags: <defaults>
</compile_context>

<pallas_src>
import functools

import jax
import jax.numpy as jnp
from jax import lax
from jax.experimental import pallas as pl
from jax.experimental.pallas import tpu as pltpu


def _mm(a, b):
    """2-D matmul, bf16 MXU operands, f32 accumulation."""
    return jnp.dot(a.astype(jnp.bfloat16), b.astype(jnp.bfloat16),
                   preferred_element_type=jnp.float32)


def _mm_t(a, b):
    """a @ b.T with the transpose folded into the MXU contraction."""
    return lax.dot_general(a.astype(jnp.bfloat16), b.astype(jnp.bfloat16),
                           dimension_numbers=(((1,), (1,)), ((), ())),
                           preferred_element_type=jnp.float32)


def triple_attention_kernel(x_ref, ww_ref, wo_ref, bo_ref, o_ref,
                            qkv_ref, up_ref, *, scale, seq_len, fuse):
    N = seq_len
    C = x_ref.shape[-1]
    bt = x_ref.shape[0] // N

    xb = x_ref[...].astype(jnp.bfloat16)                     # (bt*N, C) slab

    # 5-way projection on the whole batch-tile slab (bf16 weights).
    if fuse:                                                  # one (bt*N,C)@(C,5C) pass
        qkv_ref[...] = _mm(xb, ww_ref[...]).astype(jnp.bfloat16)
    else:                                                     # C < 128: per projection
        for k in range(5):
            qkv_ref[k] = _mm(xb, ww_ref[k]).astype(jnp.bfloat16)

    # TODO(synk): attn_drop (nn.Dropout(0.3)) on X/Y/Z is treated as identity
    # (eval-mode semantics); training-mode stochastic masking is not implemented.

    sub_align = 16 if N % 16 == 0 else (8 if N % 8 == 0 else 0)

    def seq_body(s, carry):
        lo = s * N
        if sub_align:
            lo = pl.multiple_of(lo, sub_align)

        if fuse:
            blk = qkv_ref[pl.ds(lo, N), :]                    # (N, 5C) bf16, lane-aligned slices
            a, b, c = blk[:, :C], blk[:, C:2 * C], blk[:, 2 * C:3 * C]
            v1, v2 = blk[:, 3 * C:4 * C], blk[:, 4 * C:]
        else:
            a = qkv_ref[0, pl.ds(lo, N), :]
            b = qkv_ref[1, pl.ds(lo, N), :]
            c = qkv_ref[2, pl.ds(lo, N), :]
            v1 = qkv_ref[3, pl.ds(lo, N), :]
            v2 = qkv_ref[4, pl.ds(lo, N), :]

        # TODO(synk): when N % 128 == 0, lx and lzt could be fused into one
        # _mm_t(a, concat([b, c], 0)) pass to halve the MXU push cost.
        lx = _mm_t(a, b) * scale                              # X logits   (N, N) f32
        ly = _mm_t(b, c) * scale                              # Y logits
        lzt = _mm_t(a, c) * scale                             # Z^T logits

        # Stabilized exp: the per-row scalings of X / Z^T and the global Y
        # scaling carry the same per-output-row factor in up and down, so they
        # cancel exactly and bound X/Y/Z to (0, 1] (safe bf16 MXU operands).
        X = jnp.exp(lx - jnp.max(lx, axis=-1, keepdims=True))
        Zt = jnp.exp(lzt - jnp.max(lzt, axis=-1, keepdims=True))
        my = jnp.max(jnp.max(ly, axis=-1, keepdims=True), axis=-2, keepdims=True)
        Y = jnp.exp(ly - my)

        Xb = X.astype(jnp.bfloat16)                           # cast once, reuse
        Yb = Y.astype(jnp.bfloat16)
        Ztb = Zt.astype(jnp.bfloat16)

        XY = _mm(Xb, Yb)                                      # X @ Y              (f32)
        YZt = _mm_t(Ztb, Yb)                                  # (Y@Z)^T == Zt @ Y^T (f32)

        W1 = X * YZt                                          # W1[i,m] = X[i,m]*(Y@Z)[m,i]
        W2 = XY * Zt                                          # W2[i,k] = (X@Y)[i,k]*Z[k,i]
        down = jnp.sum(W1, axis=-1, keepdims=True)            # (N, 1) == diag(X@Y@Z)
        inv_down = pl.reciprocal(down, approx=True)           # EUP slot, essentially free

        up1 = (_mm(W1, v1) * inv_down).astype(jnp.bfloat16)   # (N, C) normalized numerators
        up2 = (_mm(W2, v2) * inv_down).astype(jnp.bfloat16)

        if fuse:
            up_ref[pl.ds(lo, N), :C] = up1
            up_ref[pl.ds(lo, N), C:] = up2
        else:
            up_ref[0, pl.ds(lo, N), :] = up1
            up_ref[1, pl.ds(lo, N), :] = up2
        return carry

    lax.fori_loop(0, bt, seq_body, 0)

    # Output projection on the full slab (fused when the lane concat is aligned).
    if fuse:                                                  # one (bt*N,2C)@(2C,C) pass
        proj = _mm(up_ref[...], wo_ref[...])
    else:
        proj = _mm(up_ref[0], wo_ref[0]) + _mm(up_ref[1], wo_ref[1])
    o_ref[...] = (proj + bo_ref[...]).astype(o_ref.dtype)


def _vmem_capacity_bytes():
    try:
        return int(pltpu.get_tpu_info().vmem_capacity_bytes)
    except Exception:
        return 64 << 20            # conservative: v7x per-core VMEM


def _need_bytes(bt, N, C):
    """Full per-grid-step VMEM working set for a batch tile of `bt` sequences."""
    blocks = 4 * bt * N * C * 4                  # double-buffered f32 in + out blocks
    scratch = bt * N * 7 * C * 2                 # bf16 qkv (5C) + up (2C) scratch slabs
    weights = 2 * 7 * C * C * 2 + 2 * C * 4      # bf16 w/o weights (x2 buffers) + bias
    per_seq = 50 * N * N + 24 * N * C            # live (N,N)/(N,C) temps inside the loop
    return blocks + scratch + weights + per_seq + (1 << 16)


def _pick_batch_tile(B, N, C, budget):
    """Largest divisor of B that fits `budget` and keeps the grid >= 2 (pref. 4) steps."""
    divs = [d for d in range(1, B + 1)
            if B % d == 0 and ((d * N) % 8 == 0 or d == B)]
    if not divs:
        divs = [B]
    prefs = [n for n in (4, 2, 1) if n <= B] or [1]
    for min_nb in prefs:
        cands = [d for d in divs if B // d >= min_nb and _need_bytes(d, N, C) <= budget]
        if cands:
            return max(cands)
    return min(divs)


def triple_attention_smarter(x, ww, wo, bo, *, num_heads=1):
    """x: (B, N, C); ww: (C, 5C) = w.weight.T; wo: (2C, C) = o.weight.T; bo: (1, C)."""
    assert num_heads == 1, "kernel folds the head axis; module default is 1"
    B, N, C = x.shape
    scale = (C // num_heads) ** (-0.5)
    fuse = (C % 128 == 0)          # lane-aligned slicing of the fused (.,5C)/(.,2C) slabs

    cap = _vmem_capacity_bytes()
    budget = min(int(0.42 * cap), 56 << 20)     # ~27 MiB on v7x, ~54 MiB on v5e/v6e
    bt = _pick_batch_tile(B, N, C, budget)
    nb = B // bt

    # Wrapper-side layout prep (free XLA reshapes/casts, nothing in-kernel):
    xf = x.reshape(B * N, C)
    bo2 = bo.reshape(1, C).astype(jnp.float32)
    if fuse:
        ww_in = ww.astype(jnp.bfloat16)                                      # (C, 5C)
        wo_in = wo.astype(jnp.bfloat16)                                      # (2C, C)
        ww_spec = pl.BlockSpec((C, 5 * C), lambda i: (0, 0))
        wo_spec = pl.BlockSpec((2 * C, C), lambda i: (0, 0))
        qkv_scr = pltpu.VMEM((bt * N, 5 * C), jnp.bfloat16)
        up_scr = pltpu.VMEM((bt * N, 2 * C), jnp.bfloat16)
    else:
        ww_in = ww.reshape(C, 5, C).transpose(1, 0, 2).astype(jnp.bfloat16)  # (5, C, C)
        wo_in = wo.reshape(2, C, C).astype(jnp.bfloat16)                     # (2, C, C)
        ww_spec = pl.BlockSpec((5, C, C), lambda i: (0, 0, 0))
        wo_spec = pl.BlockSpec((2, C, C), lambda i: (0, 0, 0))
        qkv_scr = pltpu.VMEM((5, bt * N, C), jnp.bfloat16)
        up_scr = pltpu.VMEM((2, bt * N, C), jnp.bfloat16)

    need = _need_bytes(bt, N, C)
    vmem_limit = int(max(32 << 20, min(cap - (2 << 20), need + (8 << 20))))

    kern = functools.partial(triple_attention_kernel,
                             scale=scale, seq_len=N, fuse=fuse)
    out_flat = pl.pallas_call(
        kern,
        out_shape=jax.ShapeDtypeStruct((B * N, C), x.dtype),
        grid_spec=pltpu.PrefetchScalarGridSpec(
            num_scalar_prefetch=0,
            grid=(nb,),
            in_specs=[
                pl.BlockSpec((bt * N, C), lambda i: (i, 0)),
                ww_spec,
                wo_spec,
                pl.BlockSpec((1, C), lambda i: (0, 0)),
            ],
            out_specs=pl.BlockSpec((bt * N, C), lambda i: (i, 0)),
            scratch_shapes=[qkv_scr, up_scr],
        ),
        compiler_params=pltpu.CompilerParams(
            dimension_semantics=("parallel",),
            vmem_limit_bytes=vmem_limit,
        ),
    )(xf, ww_in, wo_in, bo2)
    # TODO(synk): for N where ~50*N^2 bytes of per-sequence panels exceed the
    # VMEM budget (N >= ~700 on v7x), add a query-row tile loop keeping Y resident.
    # TODO(synk): for C < 128 the output/store path is lane-masked; padding C to
    # 128 (or packing sequences across lanes) would recover lane bandwidth.
    return out_flat.reshape(B, N, C)


def reference_forward(x, ww, wo, bo):
    """Pure-JAX transcription of the PyTorch forward (eval-mode dropout)."""
    B, N, C = x.shape
    H, D = 1, C
    scale = D ** (-0.5)
    xw = x @ ww                                              # (B, N, 5C)
    w5 = xw.reshape(B, N, 5, H, D).transpose(2, 0, 3, 1, 4)  # (5, B, H, N, D)
    a, b, c, v1, v2 = w5[0], w5[1], w5[2], w5[3], w5[4]
    X = jnp.exp(jnp.einsum('bhnd,bhmd->bhnm', a, b) * scale)
    Y = jnp.exp(jnp.einsum('bhnd,bhmd->bhnm', b, c) * scale)
    Z = jnp.exp(jnp.einsum('bhnd,bhmd->bhnm', c, a) * scale)
    Vj = jnp.broadcast_to(v1[:, :, :, None, :], (B, H, N, N, D))
    Vk = jnp.broadcast_to(v2[:, :, None, :, :], (B, H, N, N, D))
    V = jnp.concatenate([Vj, Vk], axis=-1)                   # (B, H, N, N, 2D)
    YV = Y[..., None] * V
    T1 = jnp.einsum('bhij,bhjkd->bhikd', X, YV)
    up = jnp.einsum('bhijd,bhjk->bhikd', T1, Z)
    XYm = jnp.einsum('bhij,bhjk->bhik', X, Y)
    down = jnp.einsum('bhik,bhkj->bhij', XYm, Z)
    up_diag = jnp.einsum('bhiid->bhid', up)                  # (B, H, N, 2D)
    down_diag = jnp.einsum('bhii->bhi', down)                # (B, H, N)
    xo = up_diag / down_diag[..., None]
    return xo.reshape(B, N, 2 * C) @ wo + bo


if __name__ == "__main__":
    B, N, C = 2, 8, 32

    key = jax.random.PRNGKey(0)
    k1, k2, k3, k4 = jax.random.split(key, 4)

    # Deterministic parameter init (PyTorch-Linear-style uniform bounds).
    lim_w = 1.0 / (C ** 0.5)
    lim_o = 1.0 / ((2 * C) ** 0.5)
    ww = jax.random.uniform(k1, (C, 5 * C), jnp.float32, -lim_w, lim_w)   # w.weight.T
    wo = jax.random.uniform(k2, (2 * C, C), jnp.float32, -lim_o, lim_o)   # o.weight.T
    bo = jax.random.uniform(k3, (1, C), jnp.float32, -lim_o, lim_o)       # o.bias
    x = jax.random.normal(k4, (B, N, C), jnp.float32)

    out = jax.block_until_ready(triple_attention_smarter(x, ww, wo, bo))
    ref = reference_forward(x, ww, wo, bo)

    assert out.shape == (B, N, C), out.shape
    # bf16 MXU operands / bf16 accumulator scratch => bf16-level tolerance vs f32 ref.
    assert jnp.allclose(out, ref, rtol=2e-2, atol=2e-2), (
        float(jnp.max(jnp.abs(out - ref))))
    print("KERNEL_OK")
</pallas_src>

<mosaic_0001>
module attributes {stable_mosaic.version = 11 : i64} {
  func.func @triple_attention_kernel(%arg0: i32, %arg1: memref<8x32xf32, #tpu.memory_space<vmem>>, %arg2: memref<5x32x32xbf16, #tpu.memory_space<vmem>>, %arg3: memref<2x32x32xbf16, #tpu.memory_space<vmem>>, %arg4: memref<1x32xf32, #tpu.memory_space<vmem>>, %arg5: memref<8x32xf32, #tpu.memory_space<vmem>>, %arg6: memref<5x8x32xbf16, #tpu.memory_space<vmem>>, %arg7: memref<2x8x32xbf16, #tpu.memory_space<vmem>>) attributes {dimension_semantics = [#tpu.dimension_semantics<parallel>], iteration_bounds = array<i64: 2>, scalar_prefetch = 0 : i64, scratch_operands = 2 : i64, tpu.core_type = #tpu.core_type<tc>, window_params = [{transform_indices = @transform_0, window_bounds = array<i64: 8, 32>}, {pipeline_mode = #tpu.pipeline_mode<synchronous>, transform_indices = @transform_1, window_bounds = array<i64: 5, 32, 32>}, {pipeline_mode = #tpu.pipeline_mode<synchronous>, transform_indices = @transform_2, window_bounds = array<i64: 2, 32, 32>}, {pipeline_mode = #tpu.pipeline_mode<synchronous>, transform_indices = @transform_3, window_bounds = array<i64: 1, 32>}, {transform_indices = @transform_4, window_bounds = array<i64: 8, 32>}]} {
    %c0 = arith.constant 0 : index
    %c0_0 = arith.constant 0 : index
    %0 = vector.load %arg1[%c0, %c0_0] : memref<8x32xf32, #tpu.memory_space<vmem>>, vector<8x32xf32>
    %1 = arith.truncf %0 : vector<8x32xf32> to vector<8x32xbf16>
    %c0_1 = arith.constant 0 : index
    %c0_2 = arith.constant 0 : index
    %c0_3 = arith.constant 0 : index
    %2 = vector.load %arg2[%c0_1, %c0_2, %c0_3] : memref<5x32x32xbf16, #tpu.memory_space<vmem>>, vector<1x32x32xbf16>
    %3 = vector.shape_cast %2 : vector<1x32x32xbf16> to vector<32x32xbf16>
    %cst = arith.constant dense<0.000000e+00> : vector<8x32xf32>
    %4 = tpu.matmul %1, %3, %cst {dimension_numbers = #tpu.dot_dimension_numbers<[1], [0], [0], [1], [0, 0, 1, 1], [], []>} : vector<8x32xbf16>, vector<32x32xbf16>, vector<8x32xf32> -> vector<8x32xf32>
    %5 = arith.truncf %4 : vector<8x32xf32> to vector<8x32xbf16>
    %c0_4 = arith.constant 0 : index
    %c0_5 = arith.constant 0 : index
    %c0_6 = arith.constant 0 : index
    %6 = vector.load %arg6[%c0_4, %c0_5, %c0_6] : memref<5x8x32xbf16, #tpu.memory_space<vmem>>, vector<1x8x32xbf16>
    %7 = vector.shape_cast %6 : vector<1x8x32xbf16> to vector<8x32xbf16>
    %8 = vector.shape_cast %5 : vector<8x32xbf16> to vector<1x8x32xbf16>
    tpu.vector_store %arg6[%c0_4, %c0_5, %c0_6], %8 {strides = array<i32>} : memref<5x8x32xbf16, #tpu.memory_space<vmem>>, vector<1x8x32xbf16>,
    %c1 = arith.constant 1 : index
    %c0_7 = arith.constant 0 : index
    %c0_8 = arith.constant 0 : index
    %9 = vector.load %arg2[%c1, %c0_7, %c0_8] : memref<5x32x32xbf16, #tpu.memory_space<vmem>>, vector<1x32x32xbf16>
    %10 = vector.shape_cast %9 : vector<1x32x32xbf16> to vector<32x32xbf16>
    %cst_9 = arith.constant dense<0.000000e+00> : vector<8x32xf32>
    %11 = tpu.matmul %1, %10, %cst_9 {dimension_numbers = #tpu.dot_dimension_numbers<[1], [0], [0], [1], [0, 0, 1, 1], [], []>} : vector<8x32xbf16>, vector<32x32xbf16>, vector<8x32xf32> -> vector<8x32xf32>
    %12 = arith.truncf %11 : vector<8x32xf32> to vector<8x32xbf16>
    %c1_10 = arith.constant 1 : index
    %c0_11 = arith.constant 0 : index
    %c0_12 = arith.constant 0 : index
    %13 = vector.load %arg6[%c1_10, %c0_11, %c0_12] : memref<5x8x32xbf16, #tpu.memory_space<vmem>>, vector<1x8x32xbf16>
    %14 = vector.shape_cast %13 : vector<1x8x32xbf16> to vector<8x32xbf16>
    %15 = vector.shape_cast %12 : vector<8x32xbf16> to vector<1x8x32xbf16>
    tpu.vector_store %arg6[%c1_10, %c0_11, %c0_12], %15 {strides = array<i32>} : memref<5x8x32xbf16, #tpu.memory_space<vmem>>, vector<1x8x32xbf16>,
    %c2 = arith.constant 2 : index
    %c0_13 = arith.constant 0 : index
    %c0_14 = arith.constant 0 : index
    %16 = vector.load %arg2[%c2, %c0_13, %c0_14] : memref<5x32x32xbf16, #tpu.memory_space<vmem>>, vector<1x32x32xbf16>
    %17 = vector.shape_cast %16 : vector<1x32x32xbf16> to vector<32x32xbf16>
    %cst_15 = arith.constant dense<0.000000e+00> : vector<8x32xf32>
    %18 = tpu.matmul %1, %17, %cst_15 {dimension_numbers = #tpu.dot_dimension_numbers<[1], [0], [0], [1], [0, 0, 1, 1], [], []>} : vector<8x32xbf16>, vector<32x32xbf16>, vector<8x32xf32> -> vector<8x32xf32>
    %19 = arith.truncf %18 : vector<8x32xf32> to vector<8x32xbf16>
    %c2_16 = arith.constant 2 : index
    %c0_17 = arith.constant 0 : index
    %c0_18 = arith.constant 0 : index
    %20 = vector.load %arg6[%c2_16, %c0_17, %c0_18] : memref<5x8x32xbf16, #tpu.memory_space<vmem>>, vector<1x8x32xbf16>
    %21 = vector.shape_cast %20 : vector<1x8x32xbf16> to vector<8x32xbf16>
    %22 = vector.shape_cast %19 : vector<8x32xbf16> to vector<1x8x32xbf16>
    tpu.vector_store %arg6[%c2_16, %c0_17, %c0_18], %22 {strides = array<i32>} : memref<5x8x32xbf16, #tpu.memory_space<vmem>>, vector<1x8x32xbf16>,
    %c3 = arith.constant 3 : index
    %c0_19 = arith.constant 0 : index
    %c0_20 = arith.constant 0 : index
    %23 = vector.load %arg2[%c3, %c0_19, %c0_20] : memref<5x32x32xbf16, #tpu.memory_space<vmem>>, vector<1x32x32xbf16>
    %24 = vector.shape_cast %23 : vector<1x32x32xbf16> to vector<32x32xbf16>
    %cst_21 = arith.constant dense<0.000000e+00> : vector<8x32xf32>
    %25 = tpu.matmul %1, %24, %cst_21 {dimension_numbers = #tpu.dot_dimension_numbers<[1], [0], [0], [1], [0, 0, 1, 1], [], []>} : vector<8x32xbf16>, vector<32x32xbf16>, vector<8x32xf32> -> vector<8x32xf32>
    %26 = arith.truncf %25 : vector<8x32xf32> to vector<8x32xbf16>
    %c3_22 = arith.constant 3 : index
    %c0_23 = arith.constant 0 : index
    %c0_24 = arith.constant 0 : index
    %27 = vector.load %arg6[%c3_22, %c0_23, %c0_24] : memref<5x8x32xbf16, #tpu.memory_space<vmem>>, vector<1x8x32xbf16>
    %28 = vector.shape_cast %27 : vector<1x8x32xbf16> to vector<8x32xbf16>
    %29 = vector.shape_cast %26 : vector<8x32xbf16> to vector<1x8x32xbf16>
    tpu.vector_store %arg6[%c3_22, %c0_23, %c0_24], %29 {strides = array<i32>} : memref<5x8x32xbf16, #tpu.memory_space<vmem>>, vector<1x8x32xbf16>,
    %c4 = arith.constant 4 : index
    %c0_25 = arith.constant 0 : index
    %c0_26 = arith.constant 0 : index
    %30 = vector.load %arg2[%c4, %c0_25, %c0_26] : memref<5x32x32xbf16, #tpu.memory_space<vmem>>, vector<1x32x32xbf16>
    %31 = vector.shape_cast %30 : vector<1x32x32xbf16> to vector<32x32xbf16>
    %cst_27 = arith.constant dense<0.000000e+00> : vector<8x32xf32>
    %32 = tpu.matmul %1, %31, %cst_27 {dimension_numbers = #tpu.dot_dimension_numbers<[1], [0], [0], [1], [0, 0, 1, 1], [], []>} : vector<8x32xbf16>, vector<32x32xbf16>, vector<8x32xf32> -> vector<8x32xf32>
    %33 = arith.truncf %32 : vector<8x32xf32> to vector<8x32xbf16>
    %c4_28 = arith.constant 4 : index
    %c0_29 = arith.constant 0 : index
    %c0_30 = arith.constant 0 : index
    %34 = vector.load %arg6[%c4_28, %c0_29, %c0_30] : memref<5x8x32xbf16, #tpu.memory_space<vmem>>, vector<1x8x32xbf16>
    %35 = vector.shape_cast %34 : vector<1x8x32xbf16> to vector<8x32xbf16>
    %36 = vector.shape_cast %33 : vector<8x32xbf16> to vector<1x8x32xbf16>
    tpu.vector_store %arg6[%c4_28, %c0_29, %c0_30], %36 {strides = array<i32>} : memref<5x8x32xbf16, #tpu.memory_space<vmem>>, vector<1x8x32xbf16>,
    %c0_i32 = arith.constant 0 : i32
    %c8_i32 = arith.constant 8 : i32
    %37 = arith.muli %c0_i32, %c8_i32 : i32
    %38 = tpu.assume_multiple %37, 8 : i32
    %c0_31 = arith.constant 0 : index
    %39 = arith.index_cast %38 : i32 to index
    %c0_32 = arith.constant 0 : index
    %40 = vector.load %arg6[%c0_31, %39, %c0_32] : memref<5x8x32xbf16, #tpu.memory_space<vmem>>, vector<1x8x32xbf16>
    %41 = vector.shape_cast %40 : vector<1x8x32xbf16> to vector<8x32xbf16>
    %c1_33 = arith.constant 1 : index
    %42 = arith.index_cast %38 : i32 to index
    %c0_34 = arith.constant 0 : index
    %43 = vector.load %arg6[%c1_33, %42, %c0_34] : memref<5x8x32xbf16, #tpu.memory_space<vmem>>, vector<1x8x32xbf16>
    %44 = vector.shape_cast %43 : vector<1x8x32xbf16> to vector<8x32xbf16>
    %c2_35 = arith.constant 2 : index
    %45 = arith.index_cast %38 : i32 to index
    %c0_36 = arith.constant 0 : index
    %46 = vector.load %arg6[%c2_35, %45, %c0_36] : memref<5x8x32xbf16, #tpu.memory_space<vmem>>, vector<1x8x32xbf16>
    %47 = vector.shape_cast %46 : vector<1x8x32xbf16> to vector<8x32xbf16>
    %c3_37 = arith.constant 3 : index
    %48 = arith.index_cast %38 : i32 to index
    %c0_38 = arith.constant 0 : index
    %49 = vector.load %arg6[%c3_37, %48, %c0_38] : memref<5x8x32xbf16, #tpu.memory_space<vmem>>, vector<1x8x32xbf16>
    %50 = vector.shape_cast %49 : vector<1x8x32xbf16> to vector<8x32xbf16>
    %c4_39 = arith.constant 4 : index
    %51 = arith.index_cast %38 : i32 to index
    %c0_40 = arith.constant 0 : index
    %52 = vector.load %arg6[%c4_39, %51, %c0_40] : memref<5x8x32xbf16, #tpu.memory_space<vmem>>, vector<1x8x32xbf16>
    %53 = vector.shape_cast %52 : vector<1x8x32xbf16> to vector<8x32xbf16>
    %cst_41 = arith.constant dense<0.000000e+00> : vector<8x8xf32>
    %54 = tpu.matmul %41, %44, %cst_41 {dimension_numbers = #tpu.dot_dimension_numbers<[1], [1], [0], [0], [0, 0, 1, 0], [], []>} : vector<8x32xbf16>, vector<8x32xbf16>, vector<8x8xf32> -> vector<8x8xf32>
    %cst_42 = arith.constant 0.176776692 : f32
    %55 = vector.broadcast %cst_42 : f32 to vector<8x8xf32>
    %56 = arith.mulf %54, %55 : vector<8x8xf32>
    %cst_43 = arith.constant dense<0.000000e+00> : vector<8x8xf32>
    %57 = tpu.matmul %44, %47, %cst_43 {dimension_numbers = #tpu.dot_dimension_numbers<[1], [1], [0], [0], [0, 0, 1, 0], [], []>} : vector<8x32xbf16>, vector<8x32xbf16>, vector<8x8xf32> -> vector<8x8xf32>
    %cst_44 = arith.constant 0.176776692 : f32
    %58 = vector.broadcast %cst_44 : f32 to vector<8x8xf32>
    %59 = arith.mulf %57, %58 : vector<8x8xf32>
    %cst_45 = arith.constant dense<0.000000e+00> : vector<8x8xf32>
    %60 = tpu.matmul %41, %47, %cst_45 {dimension_numbers = #tpu.dot_dimension_numbers<[1], [1], [0], [0], [0, 0, 1, 0], [], []>} : vector<8x32xbf16>, vector<8x32xbf16>, vector<8x8xf32> -> vector<8x8xf32>
    %cst_46 = arith.constant 0.176776692 : f32
    %61 = vector.broadcast %cst_46 : f32 to vector<8x8xf32>
    %62 = arith.mulf %60, %61 : vector<8x8xf32>
    %cst_47 = arith.constant dense<0xFF800000> : vector<8xf32>
    %63 = vector.multi_reduction <maximumf>, %56, %cst_47 [1] : vector<8x8xf32> to vector<8xf32>
    %64 = vector.shape_cast %63 : vector<8xf32> to vector<8x1xf32>
    %65 = vector.broadcast %64 : vector<8x1xf32> to vector<8x8xf32>
    %66 = arith.subf %56, %65 : vector<8x8xf32>
    %67 = math.exp %66 : vector<8x8xf32>
    %cst_48 = arith.constant dense<0xFF800000> : vector<8xf32>
    %68 = vector.multi_reduction <maximumf>, %62, %cst_48 [1] : vector<8x8xf32> to vector<8xf32>
    %69 = vector.shape_cast %68 : vector<8xf32> to vector<8x1xf32>
    %70 = vector.broadcast %69 : vector<8x1xf32> to vector<8x8xf32>
    %71 = arith.subf %62, %70 : vector<8x8xf32>
    %72 = math.exp %71 : vector<8x8xf32>
    %cst_49 = arith.constant dense<0xFF800000> : vector<8xf32>
    %73 = vector.multi_reduction <maximumf>, %59, %cst_49 [1] : vector<8x8xf32> to vector<8xf32>
    %74 = vector.shape_cast %73 : vector<8xf32> to vector<8x1xf32>
    %cst_50 = arith.constant dense<0xFF800000> : vector<1xf32>
    %75 = vector.multi_reduction <maximumf>, %74, %cst_50 [0] : vector<8x1xf32> to vector<1xf32>
    %76 = vector.shape_cast %75 : vector<1xf32> to vector<1x1xf32>
    %77 = vector.broadcast %76 : vector<1x1xf32> to vector<8x8xf32>
    %78 = arith.subf %59, %77 : vector<8x8xf32>
    %79 = math.exp %78 : vector<8x8xf32>
    %80 = arith.truncf %67 : vector<8x8xf32> to vector<8x8xbf16>
    %81 = arith.truncf %79 : vector<8x8xf32> to vector<8x8xbf16>
    %82 = arith.truncf %72 : vector<8x8xf32> to vector<8x8xbf16>
    %cst_51 = arith.constant dense<0.000000e+00> : vector<8x8xf32>
    %83 = tpu.matmul %80, %81, %cst_51 {dimension_numbers = #tpu.dot_dimension_numbers<[1], [0], [0], [1], [0, 0, 1, 1], [], []>} : vector<8x8xbf16>, vector<8x8xbf16>, vector<8x8xf32> -> vector<8x8xf32>
    %cst_52 = arith.constant dense<0.000000e+00> : vector<8x8xf32>
    %84 = tpu.matmul %82, %81, %cst_52 {dimension_numbers = #tpu.dot_dimension_numbers<[1], [1], [0], [0], [0, 0, 1, 0], [], []>} : vector<8x8xbf16>, vector<8x8xbf16>, vector<8x8xf32> -> vector<8x8xf32>
    %85 = arith.mulf %67, %84 : vector<8x8xf32>
    %86 = arith.mulf %83, %72 : vector<8x8xf32>
    %cst_53 = arith.constant dense<0.000000e+00> : vector<8xf32>
    %87 = vector.multi_reduction <add>, %85, %cst_53 [1] : vector<8x8xf32> to vector<8xf32>
    %88 = vector.shape_cast %87 : vector<8xf32> to vector<8x1xf32>
    %89 = tpu.reciprocal %88 {approx = true} : vector<8x1xf32> -> vector<8x1xf32>
    %90 = arith.truncf %85 : vector<8x8xf32> to vector<8x8xbf16>
    %cst_54 = arith.constant dense<0.000000e+00> : vector<8x32xf32>
    %91 = tpu.matmul %90, %50, %cst_54 {dimension_numbers = #tpu.dot_dimension_numbers<[1], [0], [0], [1], [0, 0, 1, 1], [], []>} : vector<8x8xbf16>, vector<8x32xbf16>, vector<8x32xf32> -> vector<8x32xf32>
    %92 = vector.broadcast %89 : vector<8x1xf32> to vector<8x32xf32>
    %93 = arith.mulf %91, %92 : vector<8x32xf32>
    %94 = arith.truncf %93 : vector<8x32xf32> to vector<8x32xbf16>
    %95 = arith.truncf %86 : vector<8x8xf32> to vector<8x8xbf16>
    %cst_55 = arith.constant dense<0.000000e+00> : vector<8x32xf32>
    %96 = tpu.matmul %95, %53, %cst_55 {dimension_numbers = #tpu.dot_dimension_numbers<[1], [0], [0], [1], [0, 0, 1, 1], [], []>} : vector<8x8xbf16>, vector<8x32xbf16>, vector<8x32xf32> -> vector<8x32xf32>
    %97 = vector.broadcast %89 : vector<8x1xf32> to vector<8x32xf32>
    %98 = arith.mulf %96, %97 : vector<8x32xf32>
    %99 = arith.truncf %98 : vector<8x32xf32> to vector<8x32xbf16>
    %c0_56 = arith.constant 0 : index
    %100 = arith.index_cast %38 : i32 to index
    %c0_57 = arith.constant 0 : index
    %101 = vector.load %arg7[%c0_56, %100, %c0_57] : memref<2x8x32xbf16, #tpu.memory_space<vmem>>, vector<1x8x32xbf16>
    %102 = vector.shape_cast %101 : vector<1x8x32xbf16> to vector<8x32xbf16>
    %103 = vector.shape_cast %94 : vector<8x32xbf16> to vector<1x8x32xbf16>
    tpu.vector_store %arg7[%c0_56, %100, %c0_57], %103 {strides = array<i32>} : memref<2x8x32xbf16, #tpu.memory_space<vmem>>, vector<1x8x32xbf16>,
    %c1_58 = arith.constant 1 : index
    %104 = arith.index_cast %38 : i32 to index
    %c0_59 = arith.constant 0 : index
    %105 = vector.load %arg7[%c1_58, %104, %c0_59] : memref<2x8x32xbf16, #tpu.memory_space<vmem>>, vector<1x8x32xbf16>
    %106 = vector.shape_cast %105 : vector<1x8x32xbf16> to vector<8x32xbf16>
    %107 = vector.shape_cast %99 : vector<8x32xbf16> to vector<1x8x32xbf16>
    tpu.vector_store %arg7[%c1_58, %104, %c0_59], %107 {strides = array<i32>} : memref<2x8x32xbf16, #tpu.memory_space<vmem>>, vector<1x8x32xbf16>,
    %c1_i32 = arith.constant 1 : i32
    %c0_60 = arith.constant 0 : index
    %c0_61 = arith.constant 0 : index
    %c0_62 = arith.constant 0 : index
    %108 = vector.load %arg7[%c0_60, %c0_61, %c0_62] : memref<2x8x32xbf16, #tpu.memory_space<vmem>>, vector<1x8x32xbf16>
    %109 = vector.shape_cast %108 : vector<1x8x32xbf16> to vector<8x32xbf16>
    %c0_63 = arith.constant 0 : index
    %c0_64 = arith.constant 0 : index
    %c0_65 = arith.constant 0 : index
    %110 = vector.load %arg3[%c0_63, %c0_64, %c0_65] : memref<2x32x32xbf16, #tpu.memory_space<vmem>>, vector<1x32x32xbf16>
    %111 = vector.shape_cast %110 : vector<1x32x32xbf16> to vector<32x32xbf16>
    %cst_66 = arith.constant dense<0.000000e+00> : vector<8x32xf32>
    %112 = tpu.matmul %109, %111, %cst_66 {dimension_numbers = #tpu.dot_dimension_numbers<[1], [0], [0], [1], [0, 0, 1, 1], [], []>} : vector<8x32xbf16>, vector<32x32xbf16>, vector<8x32xf32> -> vector<8x32xf32>
    %c1_67 = arith.constant 1 : index
    %c0_68 = arith.constant 0 : index
    %c0_69 = arith.constant 0 : index
    %113 = vector.load %arg7[%c1_67, %c0_68, %c0_69] : memref<2x8x32xbf16, #tpu.memory_space<vmem>>, vector<1x8x32xbf16>
    %114 = vector.shape_cast %113 : vector<1x8x32xbf16> to vector<8x32xbf16>
    %c1_70 = arith.constant 1 : index
    %c0_71 = arith.constant 0 : index
    %c0_72 = arith.constant 0 : index
    %115 = vector.load %arg3[%c1_70, %c0_71, %c0_72] : memref<2x32x32xbf16, #tpu.memory_space<vmem>>, vector<1x32x32xbf16>
    %116 = vector.shape_cast %115 : vector<1x32x32xbf16> to vector<32x32xbf16>
    %cst_73 = arith.constant dense<0.000000e+00> : vector<8x32xf32>
    %117 = tpu.matmul %114, %116, %cst_73 {dimension_numbers = #tpu.dot_dimension_numbers<[1], [0], [0], [1], [0, 0, 1, 1], [], []>} : vector<8x32xbf16>, vector<32x32xbf16>, vector<8x32xf32> -> vector<8x32xf32>
    %118 = arith.addf %112, %117 : vector<8x32xf32>
    %c0_74 = arith.constant 0 : index
    %c0_75 = arith.constant 0 : index
    %119 = vector.load %arg4[%c0_74, %c0_75] : memref<1x32xf32, #tpu.memory_space<vmem>>, vector<1x32xf32>
    %120 = vector.broadcast %119 : vector<1x32xf32> to vector<8x32xf32>
    %121 = arith.addf %118, %120 : vector<8x32xf32>
    %c0_76 = arith.constant 0 : index
    %c0_77 = arith.constant 0 : index
    %122 = vector.load %arg5[%c0_76, %c0_77] : memref<8x32xf32, #tpu.memory_space<vmem>>, vector<8x32xf32>
    tpu.vector_store %arg5[%c0_76, %c0_77], %121 {strides = array<i32>} : memref<8x32xf32, #tpu.memory_space<vmem>>, vector<8x32xf32>,
    return
  }
  func.func @transform_0(%arg0: i32) -> (i32, i32) {
    %c0_i32 = arith.constant 0 : i32
    %c0_i32_0 = arith.constant 0 : i32
    return %arg0, %c0_i32 : i32, i32
  }
  func.func @transform_1(%arg0: i32) -> (i32, i32, i32) {
    %c0_i32 = arith.constant 0 : i32
    %c0_i32_0 = arith.constant 0 : i32
    %c0_i32_1 = arith.constant 0 : i32
    %c0_i32_2 = arith.constant 0 : i32
    return %c0_i32, %c0_i32_0, %c0_i32_1 : i32, i32, i32
  }
  func.func @transform_2(%arg0: i32) -> (i32, i32, i32) {
    %c0_i32 = arith.constant 0 : i32
    %c0_i32_0 = arith.constant 0 : i32
    %c0_i32_1 = arith.constant 0 : i32
    %c0_i32_2 = arith.constant 0 : i32
    return %c0_i32, %c0_i32_0, %c0_i32_1 : i32, i32, i32
  }
  func.func @transform_3(%arg0: i32) -> (i32, i32) {
    %c0_i32 = arith.constant 0 : i32
    %c0_i32_0 = arith.constant 0 : i32
    %c0_i32_1 = arith.constant 0 : i32
    return %c0_i32, %c0_i32_0 : i32, i32
  }
  func.func @transform_4(%arg0: i32) -> (i32, i32) {
    %c0_i32 = arith.constant 0 : i32
    %c0_i32_0 = arith.constant 0 : i32
    return %arg0, %c0_i32 : i32, i32
  }
}

</mosaic_0001>

<llo_original>
// kernel: tpu_custom_call.1
$region0: #{tpu_custom_call.1}
  #allocation0 [shape = 'u32[]', space=smem, size = 0x4, offset = 0x4, fixed_abs, tag = 'smem constant byte address 0x4 - core index']
  #allocation1 [shape = 'u32[144,128]{1,0:T(1,128)}', space=vmem, size = 0x12000, scoped, tag = 'internal scratch']
  #allocation2 [shape = 'bf16[5,8,32]{2,1,0:T(8,128)(2,1)}', space=vmem, size = 0x2800, scoped, tag = 'scratch operand']
  #allocation3 [shape = 'bf16[2,8,32]{2,1,0:T(8,128)(2,1)}', space=vmem, size = 0x1000, scoped, tag = 'scratch operand']
  %s0 = inlined_call_operand.hbm [shape: f32[16,32], index: 0, kind: input, shape index: {}]
  %s1 = inlined_call_operand.hbm [shape: bf16[5,32,32], index: 1, kind: input, shape index: {}]
  %s2 = inlined_call_operand.hbm [shape: bf16[2,32,32], index: 2, kind: input, shape index: {}]
  %s3 = inlined_call_operand.vmem [shape: f32[1,32], index: 3, kind: input, shape index: {}]
  %s4 = inlined_call_operand.hbm [shape: f32[16,32], index: 4, kind: output, shape index: {}]
  %s5 = sld [smem:[#allocation0]]
  $region61: #{tpu_custom_call.1} parent=0
    _
  %s7 = ssub.s32 1, %s5
  %s8 = scalar_select 0, %s7, %s5
  $region1: #{tpu_custom_call.1} parent=0
    #allocation4 [shape = 'u8[8192]{0}', space=vmem, size = 0x2000, scoped, tag = 'input window, operand 0']
    #allocation5 [shape = 's32[2]{0}', space=sflag, size = 0x8, scoped, tag = 'scoped memory for tpu_custom_call.1']
    #allocation6 [shape = 's32[2]{0}', space=sflag, size = 0x8, scoped, tag = 'scoped memory for tpu_custom_call.1']
    #allocation7 [shape = 'u8[40960]{0}', space=vmem, size = 0xa000, scoped, tag = 'input window, operand 1, single buffered']
    #allocation8 [shape = 's32[1]{0}', space=sflag, size = 0x4, scoped, tag = 'scoped memory for tpu_custom_call.1']
    #allocation9 [shape = 'u8[16384]{0}', space=vmem, size = 0x4000, scoped, tag = 'input window, operand 2, single buffered']
    #allocation10 [shape = 'u8[8192]{0}', space=vmem, size = 0x2000, scoped, tag = 'output window, operand 0']
    %9 = vsyncpa [#allocation5], 0
    %s10 = scalar_lea.sflag [#allocation5], 1
    %11 = vsyncpa %s10, 0
    %12 = vsyncpa [#allocation8], 0
    %13 = vsyncpa [#allocation6], 0
    %s14 = scalar_lea.sflag [#allocation6], 1
    %15 = vsyncpa %s14, 0
    loop: start=0, step=1, limit=4
    $region2: #{tpu_custom_call.1} parent=1 // loop_pre_header
      _
    $region3: #{tpu_custom_call.1} parent=1 // loop_header
      %s17 = sphi 0, %s21
      %p18 = scmp.ge.s32.totalorder %s17, 4
      %s27 = sphi 0, %s29
      %s30 = sphi 0, %s27
      %s31 = sphi 0, %s30
      %s47 = sphi 0, %s31
      %s51 = sphi 0, %s51
      %s53 = sphi 0, %s51
      %s54 = sphi 0, %s53
      %s68 = sphi 0, %s54
      %s72 = sphi 0, %s72
      %s74 = sphi 0, %s72
      %s75 = sphi 0, %s74
      %s89 = sphi 0, %s75
      %s93 = sphi 0, %s93
      %s95 = sphi 0, %s93
      %s96 = sphi 0, %s95
      %s110 = sphi 0, %s96
      %s116 = sphi 0, %s118
      %s119 = sphi 0, %s116
      %s120 = sphi 0, %s119
      %s136 = sphi 0, %s120
    $region4: #{tpu_custom_call.1} parent=1 // loop_header_branch
      %20 = sbr.rel (%p18) target = $region8
    $region5: #{tpu_custom_call.1} parent=1 // loop_body
      %s22 = ssub.s32 %s17, 1
      %s23 = ssub.s32 %s17, 2
      %s24 = sadd.s32 %s17, 1
      %s25 = ssub.s32 %s17, %s24
      %p26 = scmp.eq.s32.totalorder %s25, 0
      %s28 = sadd.s32 %s27, 1
      %s29 = scalar_select %p26, %s27, %s28
      %p32 = pneg %p26
      %p33 = scmp.eq.s32.totalorder %s17, 1
      %p34 = por %p32, %p33
      %p35 = scmp.ne.s32.totalorder %s27, %s30
      %p36 = scmp.eq.s32.totalorder %s17, 0
      %p37 = por %p35, %p36
      %p38 = scmp.ne.s32.totalorder %s27, %s30
      %p39 = scmp.eq.s32.totalorder %s22, 1
      %p40 = por %p38, %p39
      %p41 = scmp.ne.s32.totalorder %s30, %s31
      %p42 = scmp.eq.s32.totalorder %s22, 0
      %p43 = por %p41, %p42
      %p44 = scmp.ne.s32.totalorder %s30, %s31
      %p45 = scmp.eq.s32.totalorder %s23, 1
      %p46 = por %p44, %p45
      %p48 = scmp.ne.s32.totalorder %s31, %s47
      %p49 = scmp.eq.s32.totalorder %s23, 0
      %p50 = por %p48, %p49
      %s52 = sadd.s32 %s51, 1
      %p55 = scmp.eq.s32.totalorder %s17, 1
      %p56 = scmp.ne.s32.totalorder %s51, %s53
      %p57 = scmp.eq.s32.totalorder %s17, 0
      %p58 = por %p56, %p57
      %p59 = scmp.ne.s32.totalorder %s51, %s53
      %p60 = scmp.eq.s32.totalorder %s22, 1
      %p61 = por %p59, %p60
      %p62 = scmp.ne.s32.totalorder %s53, %s54
      %p63 = scmp.eq.s32.totalorder %s22, 0
      %p64 = por %p62, %p63
      %p65 = scmp.ne.s32.totalorder %s53, %s54
      %p66 = scmp.eq.s32.totalorder %s23, 1
      %p67 = por %p65, %p66
      %p69 = scmp.ne.s32.totalorder %s54, %s68
      %p70 = scmp.eq.s32.totalorder %s23, 0
      %p71 = por %p69, %p70
      %s73 = sadd.s32 %s72, 1
      %p76 = scmp.eq.s32.totalorder %s17, 1
      %p77 = scmp.ne.s32.totalorder %s72, %s74
      %p78 = scmp.eq.s32.totalorder %s17, 0
      %p79 = por %p77, %p78
      %p80 = scmp.ne.s32.totalorder %s72, %s74
      %p81 = scmp.eq.s32.totalorder %s22, 1
      %p82 = por %p80, %p81
      %p83 = scmp.ne.s32.totalorder %s74, %s75
      %p84 = scmp.eq.s32.totalorder %s22, 0
      %p85 = por %p83, %p84
      %p86 = scmp.ne.s32.totalorder %s74, %s75
      %p87 = scmp.eq.s32.totalorder %s23, 1
      %p88 = por %p86, %p87
      %p90 = scmp.ne.s32.totalorder %s75, %s89
      %p91 = scmp.eq.s32.totalorder %s23, 0
      %p92 = por %p90, %p91
      %s94 = sadd.s32 %s93, 1
      %p97 = scmp.eq.s32.totalorder %s17, 1
      %p98 = scmp.ne.s32.totalorder %s93, %s95
      %p99 = scmp.eq.s32.totalorder %s17, 0
      %p100 = por %p98, %p99
      %p101 = scmp.ne.s32.totalorder %s93, %s95
      %p102 = scmp.eq.s32.totalorder %s22, 1
      %p103 = por %p101, %p102
      %p104 = scmp.ne.s32.totalorder %s95, %s96
      %p105 = scmp.eq.s32.totalorder %s22, 0
      %p106 = por %p104, %p105
      %p107 = scmp.ne.s32.totalorder %s95, %s96
      %p108 = scmp.eq.s32.totalorder %s23, 1
      %p109 = por %p107, %p108
      %p111 = scmp.ne.s32.totalorder %s96, %s110
      %p112 = scmp.eq.s32.totalorder %s23, 0
      %p113 = por %p111, %p112
      %s114 = ssub.s32 %s17, %s24
      %p115 = scmp.eq.s32.totalorder %s114, 0
      %s117 = sadd.s32 %s116, 1
      %s118 = scalar_select %p115, %s116, %s117
      %p121 = pneg %p115
      %p122 = scmp.eq.s32.totalorder %s17, 1
      %p123 = por %p121, %p122
      %p124 = scmp.ne.s32.totalorder %s116, %s119
      %p125 = scmp.eq.s32.totalorder %s17, 0
      %p126 = por %p124, %p125
      %p127 = scmp.ne.s32.totalorder %s116, %s119
      %p128 = scmp.eq.s32.totalorder %s22, 1
      %p129 = por %p127, %p128
      %p130 = scmp.ne.s32.totalorder %s119, %s120
      %p131 = scmp.eq.s32.totalorder %s22, 0
      %p132 = por %p130, %p131
      %p133 = scmp.ne.s32.totalorder %s119, %s120
      %p134 = scmp.eq.s32.totalorder %s23, 1
      %p135 = por %p133, %p134
      %p137 = scmp.ne.s32.totalorder %s120, %s136
      %p138 = scmp.eq.s32.totalorder %s23, 0
      %p139 = por %p137, %p138
      %p140 = scmp.le.s32.totalorder 1, %s17
      %p141 = scmp.lt.s32.totalorder %s17, 3
      %p142 = pnand %p140, %p141
      %p143 = pneg %p142
      // Predicated region
      $region9: #{tpu_custom_call.1} parent=5 // pred_check
        _
      $region10: #{tpu_custom_call.1} parent=5 // pred_check_branch
        %145 = sbr.rel (%p142) target = $region12
      $region11: #{tpu_custom_call.1} parent=5 // pred_region
        %s146 = ssub.s32 %s17, 1
        // Predicated region
        $region13: #{tpu_custom_call.1} parent=11 // pred_check
          %p147 = pneg %p64
        $region14: #{tpu_custom_call.1} parent=11 // pred_check_branch
          %149 = sbr.rel (%p147) target = $region16
        $region15: #{tpu_custom_call.1} parent=11 // pred_region
          %s151 = ssub.s32 1280, 1280
          %152 = vsyncadd [#allocation8], %s151
          %s153 = sshll.u32 [#allocation7], 4
          %s154 = int_to_ptr.vmem [resolvable:$true] %s153
          %159 = dma.hbm_to_vmem [thread:$0]  %s1, 1280, %s154, [#allocation8], 64, 64, 4
        $region16: #{tpu_custom_call.1} parent=11 // pred_fallthru
          _
        // Predicated region
        $region17: #{tpu_custom_call.1} parent=11 // pred_check
          %p160 = pneg %p85
        $region18: #{tpu_custom_call.1} parent=11 // pred_check_branch
          %162 = sbr.rel (%p160) target = $region20
        $region19: #{tpu_custom_call.1} parent=11 // pred_region
          %s164 = ssub.s32 512, 512
          %165 = vsyncadd [#allocation8], %s164
          %s166 = sshll.u32 [#allocation9], 4
          %s167 = int_to_ptr.vmem [resolvable:$true] %s166
          %172 = dma.hbm_to_vmem [thread:$0]  %s2, 512, %s167, [#allocation8], 64, 64, 4
        $region20: #{tpu_custom_call.1} parent=11 // pred_fallthru
          _
        // Predicated region
        $region21: #{tpu_custom_call.1} parent=11 // pred_check
          %p173 = pneg %p106
        $region22: #{tpu_custom_call.1} parent=11 // pred_check_branch
          %175 = sbr.rel (%p173) target = $region24
        $region23: #{tpu_custom_call.1} parent=11 // pred_region
          _
        $region24: #{tpu_custom_call.1} parent=11 // pred_fallthru
          _
      $region12: #{tpu_custom_call.1} parent=5 // pred_fallthru
        _
      %p176 = scmp.lt.s32.totalorder %s17, 2
      // Predicated region
      $region25: #{tpu_custom_call.1} parent=5 // pred_check
        %p177 = pneg %p176
      $region26: #{tpu_custom_call.1} parent=5 // pred_check_branch
        %179 = sbr.rel (%p177) target = $region28
      $region27: #{tpu_custom_call.1} parent=5 // pred_region
        // Predicated region
        $region29: #{tpu_custom_call.1} parent=27 // pred_check
          %p180 = pneg %p37
        $region30: #{tpu_custom_call.1} parent=27 // pred_check_branch
          %182 = sbr.rel (%p180) target = $region32
        $region31: #{tpu_custom_call.1} parent=27 // pred_region
          %s183 = sand.u32 %s27, 1
          %s184 = scalar_lea.sflag [#allocation5], %s183
          %s185 = sand.u32 %s27, 1
          %s186 = smul.addr %s185, 8
          %s187 = scalar_lea.vmem [#allocation4], %s186
          %s189 = ssub.s32 128, 128
          %190 = vsyncadd %s184, %s189
          %s191 = smul.addr %s17, 128
          %s192 = scalar_lea.hbm %s0, %s191
          %s194 = sshll.u32 %s187, 4
          %s195 = int_to_ptr.vmem [resolvable:$true] %s194
          %197 = dma.hbm_to_vmem [thread:$0]  %s192, 128, %s195, %s184
        $region32: #{tpu_custom_call.1} parent=27 // pred_fallthru
          _
      $region28: #{tpu_custom_call.1} parent=5 // pred_fallthru
        _
      %p198 = scmp.le.s32.totalorder 1, %s17
      %p199 = scmp.lt.s32.totalorder %s17, 3
      %p200 = pnand %p198, %p199
      %p201 = pneg %p200
      // Predicated region
      $region33: #{tpu_custom_call.1} parent=5 // pred_check
        _
      $region34: #{tpu_custom_call.1} parent=5 // pred_check_branch
        %203 = sbr.rel (%p200) target = $region36
      $region35: #{tpu_custom_call.1} parent=5 // pred_region
        %s204 = ssub.s32 %s17, 1
        %s205 = sand.u32 %s30, 1
        %s206 = scalar_lea.sflag [#allocation5], %s205
        %s207 = sand.u32 %s30, 1
        %s208 = smul.addr %s207, 8
        %s209 = scalar_lea.vmem [#allocation4], %s208
        // Predicated region
        $region37: #{tpu_custom_call.1} parent=35 // pred_check
          %p210 = pneg %p43
        $region38: #{tpu_custom_call.1} parent=35 // pred_check_branch
          %212 = sbr.rel (%p210) target = $region40
        $region39: #{tpu_custom_call.1} parent=35 // pred_region
          %213 = dma.done %s206, 128
        $region40: #{tpu_custom_call.1} parent=35 // pred_fallthru
          _
        // Predicated region
        $region41: #{tpu_custom_call.1} parent=35 // pred_check
          %p214 = pneg %p64
        $region42: #{tpu_custom_call.1} parent=35 // pred_check_branch
          %216 = sbr.rel (%p214) target = $region44
        $region43: #{tpu_custom_call.1} parent=35 // pred_region
          %217 = dma.done [#allocation8], 1280
        $region44: #{tpu_custom_call.1} parent=35 // pred_fallthru
          _
        // Predicated region
        $region45: #{tpu_custom_call.1} parent=35 // pred_check
          %p218 = pneg %p85
        $region46: #{tpu_custom_call.1} parent=35 // pred_check_branch
          %220 = sbr.rel (%p218) target = $region48
        $region47: #{tpu_custom_call.1} parent=35 // pred_region
          %221 = dma.done [#allocation8], 512
        $region48: #{tpu_custom_call.1} parent=35 // pred_fallthru
          _
        %s222 = sand.u32 %s30, 1
        %s223 = scalar_lea.sflag [#allocation5], %s222
        %s224 = sand.u32 %s30, 1
        %s225 = smul.addr %s224, 8
        %s226 = scalar_lea.vmem [#allocation4], %s225
        %p227 = pneg %p43
        %p228 = pneg %p40
        %p229 = pneg %p64
        %p230 = pneg %p61
        %p231 = pneg %p85
        %p232 = pneg %p82
        %p233 = pneg %p106
        %p234 = pneg %p103
        %p235 = pneg %p132
        %p236 = pneg %p129
        %s237 = sand.u32 %s119, 1
        %s238 = scalar_lea.sflag [#allocation6], %s237
        %s239 = sand.u32 %s119, 1
        %s240 = smul.addr %s239, 8
        %s241 = scalar_lea.vmem [#allocation10], %s240
        %v243 = vld [vmem:[%s209] sm:$0xff]
        %v244 = vpack.c.bf16 %v243, %v243
        %v245 = vld [vmem:[#allocation7] sm:$0xf]
        %v246 = vld [vmem:[#allocation7 + $0x4] sm:$0xf]
        %v247 = vld [vmem:[#allocation7 + $0x8] sm:$0xf]
        %v248 = vld [vmem:[#allocation7 + $0xc] sm:$0xf]
        %v253 = vunpack.c.l.b16 %v245
        %v254 = vunpack.c.l.b16 %v246
        %v255 = vunpack.c.l.b16 %v247
        %v256 = vunpack.c.l.b16 %v248
        %v257 = vpack.c.b16 %v254, %v253
        %v258 = vpack.c.b16 %v256, %v255
        %vm261 = vcmask 261120
        %v263 = vsel %vm261, %v244, 0
        %265 = vmatprep.subr.bf16.mxu0 0
        %266 = vmatpush1.bf16.msra.mxu0 %v257
        %267 = vmatprep.subr.bf16.mxu0 0
        %268 = vmatpush1.bf16.msra.mxu0 %v258
        %269 = vmatprep.subr.bf16.mxu0 0
        %270 = vmatpush1.bf16.msra.mxu0 0
        %271 = vmatprep.subr.bf16.mxu0 0
        %272 = vmatpush1.bf16.msra.mxu0 0
        %273 = vmatprep.subr.bf16.mxu0 0
        %274 = vmatpush1.bf16.msra.mxu0 0
        %275 = vmatprep.subr.bf16.mxu0 0
        %276 = vmatpush1.bf16.msra.mxu0 0
        %277 = vmatprep.subr.bf16.mxu0 0
        %278 = vmatpush1.bf16.msra.mxu0 0
        %279 = vmatprep.subr.bf16.mxu0 0
        %280 = vmatpush1.bf16.msra.mxu0 0
        %281 = vmatprep.subr.bf16.mxu0 0
        %282 = vmatpush1.bf16.msra.mxu0 0
        %283 = vmatprep.subr.bf16.mxu0 0
        %284 = vmatpush1.bf16.msra.mxu0 0
        %285 = vmatprep.subr.bf16.mxu0 0
        %286 = vmatpush1.bf16.msra.mxu0 0
        %287 = vmatprep.subr.bf16.mxu0 0
        %288 = vmatpush1.bf16.msra.mxu0 0
        %289 = vmatprep.subr.bf16.mxu0 0
        %290 = vmatpush1.bf16.msra.mxu0 0
        %291 = vmatprep.subr.bf16.mxu0 0
        %292 = vmatpush1.bf16.msra.mxu0 0
        %293 = vmatprep.subr.bf16.mxu0 0
        %294 = vmatpush1.bf16.msra.mxu0 0
        %295 = vmatprep.subr.bf16.mxu0 0
        %296 = vmatpush1.bf16.msra.mxu0 0
        %297 = vmatprep.mubr.bf16.mxu0 0
        %298 = vmatmul.mubr.bf16.gmra.mrb[0].mxu0 %v263
        %v299 = vpop.f32.mrb[0].mxu0
        %v300 = vadd.f32 0.0, %v299
        %v301 = vpop.f32.mrb[0].mxu0
        %v302 = vpop.f32.mrb[0].mxu0
        %v303 = vpop.f32.mrb[0].mxu0
        %304 = vdwg.mxu0
        %v305 = vpack.c.bf16 %v300, %v300
        %vm306 = vcmask 257024
        %307 = vst.msk [vmem:[#allocation2] sm:$0xf] %vm306, %v305
        %s308 = scalar_lea.vmem [#allocation7], 16
        %v309 = vld [vmem:[%s308] sm:$0xf]
        %v310 = vld [vmem:[%s308 + $0x4] sm:$0xf]
        %v311 = vld [vmem:[%s308 + $0x8] sm:$0xf]
        %v312 = vld [vmem:[%s308 + $0xc] sm:$0xf]
        %v317 = vunpack.c.l.b16 %v309
        %v318 = vunpack.c.l.b16 %v310
        %v319 = vunpack.c.l.b16 %v311
        %v320 = vunpack.c.l.b16 %v312
        %v321 = vpack.c.b16 %v318, %v317
        %v322 = vpack.c.b16 %v320, %v319
        %325 = vmatprep.subr.bf16.mxu0 0
        %326 = vmatpush1.bf16.msra.mxu0 %v321
        %327 = vmatprep.subr.bf16.mxu0 0
        %328 = vmatpush1.bf16.msra.mxu0 %v322
        %329 = vmatprep.subr.bf16.mxu0 0
        %330 = vmatpush1.bf16.msra.mxu0 0
        %331 = vmatprep.subr.bf16.mxu0 0
        %332 = vmatpush1.bf16.msra.mxu0 0
        %333 = vmatprep.subr.bf16.mxu0 0
        %334 = vmatpush1.bf16.msra.mxu0 0
        %335 = vmatprep.subr.bf16.mxu0 0
        %336 = vmatpush1.bf16.msra.mxu0 0
        %337 = vmatprep.subr.bf16.mxu0 0
        %338 = vmatpush1.bf16.msra.mxu0 0
        %339 = vmatprep.subr.bf16.mxu0 0
        %340 = vmatpush1.bf16.msra.mxu0 0
        %341 = vmatprep.subr.bf16.mxu0 0
        %342 = vmatpush1.bf16.msra.mxu0 0
        %343 = vmatprep.subr.bf16.mxu0 0
        %344 = vmatpush1.bf16.msra.mxu0 0
        %345 = vmatprep.subr.bf16.mxu0 0
        %346 = vmatpush1.bf16.msra.mxu0 0
        %347 = vmatprep.subr.bf16.mxu0 0
        %348 = vmatpush1.bf16.msra.mxu0 0
        %349 = vmatprep.subr.bf16.mxu0 0
        %350 = vmatpush1.bf16.msra.mxu0 0
        %351 = vmatprep.subr.bf16.mxu0 0
        %352 = vmatpush1.bf16.msra.mxu0 0
        %353 = vmatprep.subr.bf16.mxu0 0
        %354 = vmatpush1.bf16.msra.mxu0 0
        %355 = vmatprep.subr.bf16.mxu0 0
        %356 = vmatpush1.bf16.msra.mxu0 0
        %357 = vmatprep.mubr.bf16.mxu0 0
        %358 = vmatmul.mubr.bf16.gmra.mrb[0].mxu0 %v263
        %v359 = vpop.f32.mrb[0].mxu0
        %v360 = vadd.f32 0.0, %v359
        %v361 = vpop.f32.mrb[0].mxu0
        %v362 = vpop.f32.mrb[0].mxu0
        %v363 = vpop.f32.mrb[0].mxu0
        %364 = vdwg.mxu0
        %v365 = vpack.c.bf16 %v360, %v360
        %s366 = scalar_lea.vmem [#allocation2], 4
        %367 = vst.msk [vmem:[%s366] sm:$0xf] %vm306, %v365
        %s368 = scalar_lea.vmem [#allocation7], 32
        %v369 = vld [vmem:[%s368] sm:$0xf]
        %v370 = vld [vmem:[%s368 + $0x4] sm:$0xf]
        %v371 = vld [vmem:[%s368 + $0x8] sm:$0xf]
        %v372 = vld [vmem:[%s368 + $0xc] sm:$0xf]
        %v377 = vunpack.c.l.b16 %v369
        %v378 = vunpack.c.l.b16 %v370
        %v379 = vunpack.c.l.b16 %v371
        %v380 = vunpack.c.l.b16 %v372
        %v381 = vpack.c.b16 %v378, %v377
        %v382 = vpack.c.b16 %v380, %v379
        %385 = vmatprep.subr.bf16.mxu0 0
        %386 = vmatpush1.bf16.msra.mxu0 %v381
        %387 = vmatprep.subr.bf16.mxu0 0
        %388 = vmatpush1.bf16.msra.mxu0 %v382
        %389 = vmatprep.subr.bf16.mxu0 0
        %390 = vmatpush1.bf16.msra.mxu0 0
        %391 = vmatprep.subr.bf16.mxu0 0
        %392 = vmatpush1.bf16.msra.mxu0 0
        %393 = vmatprep.subr.bf16.mxu0 0
        %394 = vmatpush1.bf16.msra.mxu0 0
        %395 = vmatprep.subr.bf16.mxu0 0
        %396 = vmatpush1.bf16.msra.mxu0 0
        %397 = vmatprep.subr.bf16.mxu0 0
        %398 = vmatpush1.bf16.msra.mxu0 0
        %399 = vmatprep.subr.bf16.mxu0 0
        %400 = vmatpush1.bf16.msra.mxu0 0
        %401 = vmatprep.subr.bf16.mxu0 0
        %402 = vmatpush1.bf16.msra.mxu0 0
        %403 = vmatprep.subr.bf16.mxu0 0
        %404 = vmatpush1.bf16.msra.mxu0 0
        %405 = vmatprep.subr.bf16.mxu0 0
        %406 = vmatpush1.bf16.msra.mxu0 0
        %407 = vmatprep.subr.bf16.mxu0 0
        %408 = vmatpush1.bf16.msra.mxu0 0
        %409 = vmatprep.subr.bf16.mxu0 0
        %410 = vmatpush1.bf16.msra.mxu0 0
        %411 = vmatprep.subr.bf16.mxu0 0
        %412 = vmatpush1.bf16.msra.mxu0 0
        %413 = vmatprep.subr.bf16.mxu0 0
        %414 = vmatpush1.bf16.msra.mxu0 0
        %415 = vmatprep.subr.bf16.mxu0 0
        %416 = vmatpush1.bf16.msra.mxu0 0
        %417 = vmatprep.mubr.bf16.mxu0 0
        %418 = vmatmul.mubr.bf16.gmra.mrb[0].mxu0 %v263
        %v419 = vpop.f32.mrb[0].mxu0
        %v420 = vadd.f32 0.0, %v419
        %v421 = vpop.f32.mrb[0].mxu0
        %v422 = vpop.f32.mrb[0].mxu0
        %v423 = vpop.f32.mrb[0].mxu0
        %424 = vdwg.mxu0
        %v425 = vpack.c.bf16 %v420, %v420
        %s426 = scalar_lea.vmem [#allocation2], 8
        %427 = vst.msk [vmem:[%s426] sm:$0xf] %vm306, %v425
        %s428 = scalar_lea.vmem [#allocation7], 48
        %v429 = vld [vmem:[%s428] sm:$0xf]
        %v430 = vld [vmem:[%s428 + $0x4] sm:$0xf]
        %v431 = vld [vmem:[%s428 + $0x8] sm:$0xf]
        %v432 = vld [vmem:[%s428 + $0xc] sm:$0xf]
        %v437 = vunpack.c.l.b16 %v429
        %v438 = vunpack.c.l.b16 %v430
        %v439 = vunpack.c.l.b16 %v431
        %v440 = vunpack.c.l.b16 %v432
        %v441 = vpack.c.b16 %v438, %v437
        %v442 = vpack.c.b16 %v440, %v439
        %445 = vmatprep.subr.bf16.mxu0 0
        %446 = vmatpush1.bf16.msra.mxu0 %v441
        %447 = vmatprep.subr.bf16.mxu0 0
        %448 = vmatpush1.bf16.msra.mxu0 %v442
        %449 = vmatprep.subr.bf16.mxu0 0
        %450 = vmatpush1.bf16.msra.mxu0 0
        %451 = vmatprep.subr.bf16.mxu0 0
        %452 = vmatpush1.bf16.msra.mxu0 0
        %453 = vmatprep.subr.bf16.mxu0 0
        %454 = vmatpush1.bf16.msra.mxu0 0
        %455 = vmatprep.subr.bf16.mxu0 0
        %456 = vmatpush1.bf16.msra.mxu0 0
        %457 = vmatprep.subr.bf16.mxu0 0
        %458 = vmatpush1.bf16.msra.mxu0 0
        %459 = vmatprep.subr.bf16.mxu0 0
        %460 = vmatpush1.bf16.msra.mxu0 0
        %461 = vmatprep.subr.bf16.mxu0 0
        %462 = vmatpush1.bf16.msra.mxu0 0
        %463 = vmatprep.subr.bf16.mxu0 0
        %464 = vmatpush1.bf16.msra.mxu0 0
        %465 = vmatprep.subr.bf16.mxu0 0
        %466 = vmatpush1.bf16.msra.mxu0 0
        %467 = vmatprep.subr.bf16.mxu0 0
        %468 = vmatpush1.bf16.msra.mxu0 0
        %469 = vmatprep.subr.bf16.mxu0 0
        %470 = vmatpush1.bf16.msra.mxu0 0
        %471 = vmatprep.subr.bf16.mxu0 0
        %472 = vmatpush1.bf16.msra.mxu0 0
        %473 = vmatprep.subr.bf16.mxu0 0
        %474 = vmatpush1.bf16.msra.mxu0 0
        %475 = vmatprep.subr.bf16.mxu0 0
        %476 = vmatpush1.bf16.msra.mxu0 0
        %477 = vmatprep.mubr.bf16.mxu0 0
        %478 = vmatmul.mubr.bf16.gmra.mrb[0].mxu0 %v263
        %v479 = vpop.f32.mrb[0].mxu0
        %v480 = vadd.f32 0.0, %v479
        %v481 = vpop.f32.mrb[0].mxu0
        %v482 = vpop.f32.mrb[0].mxu0
        %v483 = vpop.f32.mrb[0].mxu0
        %484 = vdwg.mxu0
        %v485 = vpack.c.bf16 %v480, %v480
        %s486 = scalar_lea.vmem [#allocation2], 12
        %487 = vst.msk [vmem:[%s486] sm:$0xf] %vm306, %v485
        %s488 = scalar_lea.vmem [#allocation7], 64
        %v489 = vld [vmem:[%s488] sm:$0xf]
        %v490 = vld [vmem:[%s488 + $0x4] sm:$0xf]
        %v491 = vld [vmem:[%s488 + $0x8] sm:$0xf]
        %v492 = vld [vmem:[%s488 + $0xc] sm:$0xf]
        %v497 = vunpack.c.l.b16 %v489
        %v498 = vunpack.c.l.b16 %v490
        %v499 = vunpack.c.l.b16 %v491
        %v500 = vunpack.c.l.b16 %v492
        %v501 = vpack.c.b16 %v498, %v497
        %v502 = vpack.c.b16 %v500, %v499
        %505 = vmatprep.subr.bf16.mxu0 0
        %506 = vmatpush1.bf16.msra.mxu0 %v501
        %507 = vmatprep.subr.bf16.mxu0 0
        %508 = vmatpush1.bf16.msra.mxu0 %v502
        %509 = vmatprep.subr.bf16.mxu0 0
        %510 = vmatpush1.bf16.msra.mxu0 0
        %511 = vmatprep.subr.bf16.mxu0 0
        %512 = vmatpush1.bf16.msra.mxu0 0
        %513 = vmatprep.subr.bf16.mxu0 0
        %514 = vmatpush1.bf16.msra.mxu0 0
        %515 = vmatprep.subr.bf16.mxu0 0
        %516 = vmatpush1.bf16.msra.mxu0 0
        %517 = vmatprep.subr.bf16.mxu0 0
        %518 = vmatpush1.bf16.msra.mxu0 0
        %519 = vmatprep.subr.bf16.mxu0 0
        %520 = vmatpush1.bf16.msra.mxu0 0
        %521 = vmatprep.subr.bf16.mxu0 0
        %522 = vmatpush1.bf16.msra.mxu0 0
        %523 = vmatprep.subr.bf16.mxu0 0
        %524 = vmatpush1.bf16.msra.mxu0 0
        %525 = vmatprep.subr.bf16.mxu0 0
        %526 = vmatpush1.bf16.msra.mxu0 0
        %527 = vmatprep.subr.bf16.mxu0 0
        %528 = vmatpush1.bf16.msra.mxu0 0
        %529 = vmatprep.subr.bf16.mxu0 0
        %530 = vmatpush1.bf16.msra.mxu0 0
        %531 = vmatprep.subr.bf16.mxu0 0
        %532 = vmatpush1.bf16.msra.mxu0 0
        %533 = vmatprep.subr.bf16.mxu0 0
        %534 = vmatpush1.bf16.msra.mxu0 0
        %535 = vmatprep.subr.bf16.mxu0 0
        %536 = vmatpush1.bf16.msra.mxu0 0
        %537 = vmatprep.mubr.bf16.mxu0 0
        %538 = vmatmul.mubr.bf16.gmra.mrb[0].mxu0 %v263
        %v539 = vpop.f32.mrb[0].mxu0
        %v540 = vadd.f32 0.0, %v539
        %v541 = vpop.f32.mrb[0].mxu0
        %v542 = vpop.f32.mrb[0].mxu0
        %v543 = vpop.f32.mrb[0].mxu0
        %544 = vdwg.mxu0
        %v545 = vpack.c.bf16 %v540, %v540
        %s546 = scalar_lea.vmem [#allocation2], 16
        %547 = vst.msk [vmem:[%s546] sm:$0xf] %vm306, %v545
        %v548 = vld [vmem:[#allocation2] sm:$0xf]
        %s549 = sadd.s32 0, 1
        %s550 = smul.addr %s549, 4
        %s551 = scalar_lea.vmem [#allocation2], %s550
        %v552 = vld [vmem:[%s551] sm:$0xf]
        %s553 = sadd.s32 0, 2
        %s554 = smul.addr %s553, 4
        %s555 = scalar_lea.vmem [#allocation2], %s554
        %v556 = vld [vmem:[%s555] sm:$0xf]
        %s557 = sadd.s32 0, 3
        %s558 = smul.addr %s557, 4
        %s559 = scalar_lea.vmem [#allocation2], %s558
        %v560 = vld [vmem:[%s559] sm:$0xf]
        %s561 = sadd.s32 0, 4
        %s562 = smul.addr %s561, 4
        %s563 = scalar_lea.vmem [#allocation2], %s562
        %v564 = vld [vmem:[%s563] sm:$0xf]
        %v566 = vsel %vm261, %v548, 0
        %v569 = vsel %vm261, %v552, 0
        %571 = vmatprep.subr.bf16.mxu0 0
        %572 = vmatpush1.bf16.xpose.msra.mxu0 %v569
        %573 = vmatprep.subr.bf16.mxu0 0
        %574 = vmatpush1.bf16.xpose.msra.mxu0 0
        %575 = vmatprep.subr.bf16.mxu0 0
        %576 = vmatpush1.bf16.xpose.msra.mxu0 0
        %577 = vmatprep.subr.bf16.mxu0 0
        %578 = vmatpush1.bf16.xpose.msra.mxu0 0
        %579 = vmatprep.subr.bf16.mxu0 0
        %580 = vmatpush1.bf16.xpose.msra.mxu0 0
        %581 = vmatprep.subr.bf16.mxu0 0
        %582 = vmatpush1.bf16.xpose.msra.mxu0 0
        %583 = vmatprep.subr.bf16.mxu0 0
        %584 = vmatpush1.bf16.xpose.msra.mxu0 0
        %585 = vmatprep.subr.bf16.mxu0 0
        %586 = vmatpush1.bf16.xpose.msra.mxu0 0
        %587 = vmatprep.subr.bf16.mxu0 0
        %588 = vmatpush1.bf16.xpose.msra.mxu0 0
        %589 = vmatprep.subr.bf16.mxu0 0
        %590 = vmatpush1.bf16.xpose.msra.mxu0 0
        %591 = vmatprep.subr.bf16.mxu0 0
        %592 = vmatpush1.bf16.xpose.msra.mxu0 0
        %593 = vmatprep.subr.bf16.mxu0 0
        %594 = vmatpush1.bf16.xpose.msra.mxu0 0
        %595 = vmatprep.subr.bf16.mxu0 0
        %596 = vmatpush1.bf16.xpose.msra.mxu0 0
        %597 = vmatprep.subr.bf16.mxu0 0
        %598 = vmatpush1.bf16.xpose.msra.mxu0 0
        %599 = vmatprep.subr.bf16.mxu0 0
        %600 = vmatpush1.bf16.xpose.msra.mxu0 0
        %601 = vmatprep.subr.bf16.mxu0 0
        %602 = vmatpush1.bf16.xpose.msra.mxu0 0
        %603 = vmatprep.mubr.bf16.mxu0 0
        %604 = vmatmul.mubr.bf16.gmra.mrb[0].mxu0 %v566
        %v605 = vpop.f32.mrb[0].mxu0
        %v606 = vadd.f32 0.0, %v605
        %v607 = vpop.f32.mrb[0].mxu0
        %v608 = vpop.f32.mrb[0].mxu0
        %v609 = vpop.f32.mrb[0].mxu0
        %610 = vdwg.mxu0
        %v611 = vmul.f32 %v606, 0.17677669
        %v613 = vsel %vm261, %v556, 0
        %615 = vmatprep.subr.bf16.mxu0 0
        %616 = vmatpush1.bf16.xpose.msra.mxu0 %v613
        %617 = vmatprep.subr.bf16.mxu0 0
        %618 = vmatpush1.bf16.xpose.msra.mxu0 0
        %619 = vmatprep.subr.bf16.mxu0 0
        %620 = vmatpush1.bf16.xpose.msra.mxu0 0
        %621 = vmatprep.subr.bf16.mxu0 0
        %622 = vmatpush1.bf16.xpose.msra.mxu0 0
        %623 = vmatprep.subr.bf16.mxu0 0
        %624 = vmatpush1.bf16.xpose.msra.mxu0 0
        %625 = vmatprep.subr.bf16.mxu0 0
        %626 = vmatpush1.bf16.xpose.msra.mxu0 0
        %627 = vmatprep.subr.bf16.mxu0 0
        %628 = vmatpush1.bf16.xpose.msra.mxu0 0
        %629 = vmatprep.subr.bf16.mxu0 0
        %630 = vmatpush1.bf16.xpose.msra.mxu0 0
        %631 = vmatprep.subr.bf16.mxu0 0
        %632 = vmatpush1.bf16.xpose.msra.mxu0 0
        %633 = vmatprep.subr.bf16.mxu0 0
        %634 = vmatpush1.bf16.xpose.msra.mxu0 0
        %635 = vmatprep.subr.bf16.mxu0 0
        %636 = vmatpush1.bf16.xpose.msra.mxu0 0
        %637 = vmatprep.subr.bf16.mxu0 0
        %638 = vmatpush1.bf16.xpose.msra.mxu0 0
        %639 = vmatprep.subr.bf16.mxu0 0
        %640 = vmatpush1.bf16.xpose.msra.mxu0 0
        %641 = vmatprep.subr.bf16.mxu0 0
        %642 = vmatpush1.bf16.xpose.msra.mxu0 0
        %643 = vmatprep.subr.bf16.mxu0 0
        %644 = vmatpush1.bf16.xpose.msra.mxu0 0
        %645 = vmatprep.subr.bf16.mxu0 0
        %646 = vmatpush1.bf16.xpose.msra.mxu0 0
        %647 = vmatprep.mubr.bf16.mxu0 0
        %648 = vmatmul.mubr.bf16.gmra.mrb[0].mxu0 %v569
        %v649 = vpop.f32.mrb[0].mxu0
        %v650 = vadd.f32 0.0, %v649
        %v651 = vpop.f32.mrb[0].mxu0
        %v652 = vpop.f32.mrb[0].mxu0
        %v653 = vpop.f32.mrb[0].mxu0
        %654 = vdwg.mxu0
        %v655 = vmul.f32 %v650, 0.17677669
        %656 = vmatprep.subr.bf16.mxu0 0
        %657 = vmatpush1.bf16.xpose.msra.mxu0 %v613
        %658 = vmatprep.subr.bf16.mxu0 0
        %659 = vmatpush1.bf16.xpose.msra.mxu0 0
        %660 = vmatprep.subr.bf16.mxu0 0
        %661 = vmatpush1.bf16.xpose.msra.mxu0 0
        %662 = vmatprep.subr.bf16.mxu0 0
        %663 = vmatpush1.bf16.xpose.msra.mxu0 0
        %664 = vmatprep.subr.bf16.mxu0 0
        %665 = vmatpush1.bf16.xpose.msra.mxu0 0
        %666 = vmatprep.subr.bf16.mxu0 0
        %667 = vmatpush1.bf16.xpose.msra.mxu0 0
        %668 = vmatprep.subr.bf16.mxu0 0
        %669 = vmatpush1.bf16.xpose.msra.mxu0 0
        %670 = vmatprep.subr.bf16.mxu0 0
        %671 = vmatpush1.bf16.xpose.msra.mxu0 0
        %672 = vmatprep.subr.bf16.mxu0 0
        %673 = vmatpush1.bf16.xpose.msra.mxu0 0
        %674 = vmatprep.subr.bf16.mxu0 0
        %675 = vmatpush1.bf16.xpose.msra.mxu0 0
        %676 = vmatprep.subr.bf16.mxu0 0
        %677 = vmatpush1.bf16.xpose.msra.mxu0 0
        %678 = vmatprep.subr.bf16.mxu0 0
        %679 = vmatpush1.bf16.xpose.msra.mxu0 0
        %680 = vmatprep.subr.bf16.mxu0 0
        %681 = vmatpush1.bf16.xpose.msra.mxu0 0
        %682 = vmatprep.subr.bf16.mxu0 0
        %683 = vmatpush1.bf16.xpose.msra.mxu0 0
        %684 = vmatprep.subr.bf16.mxu0 0
        %685 = vmatpush1.bf16.xpose.msra.mxu0 0
        %686 = vmatprep.subr.bf16.mxu0 0
        %687 = vmatpush1.bf16.xpose.msra.mxu0 0
        %688 = vmatprep.mubr.bf16.mxu0 0
        %689 = vmatmul.mubr.bf16.gmra.mrb[0].mxu0 %v566
        %v690 = vpop.f32.mrb[0].mxu0
        %v691 = vadd.f32 0.0, %v690
        %v692 = vpop.f32.mrb[0].mxu0
        %v693 = vpop.f32.mrb[0].mxu0
        %v694 = vpop.f32.mrb[0].mxu0
        %695 = vdwg.mxu0
        %v696 = vmul.f32 %v691, 0.17677669
        %vm697 = vcmask 64512
        %v698 = vsel %vm697, %v611, -inf
        %699 = vmax.xlane.f32.xlu0 %v698
        %v700 = vpop.xlane.xlu0 %699
        %v701 = vsub.f32 %v611, %v700
        %v702 = vmul.f32 %v701, 1.442695
        %v703 = vpow.pop %v702
        %v704 = vsel %vm697, %v696, -inf
        %705 = vmax.xlane.f32.xlu0 %v704
        %v706 = vpop.xlane.xlu0 %705
        %v707 = vsub.f32 %v696, %v706
        %v708 = vmul.f32 %v707, 1.442695
        %v709 = vpow.pop %v708
        %v710 = vsel %vm697, %v655, -inf
        %711 = vmax.xlane.f32.xlu0 %v710
        %v712 = vpop.xlane.xlu0 %711
        %v713 = vrot.slane %v712, 4
        %v714 = vmax.f32 %v712, %v713
        %v715 = vrot.slane %v714, 2
        %v716 = vmax.f32 %v714, %v715
        %v717 = vrot.slane %v716, 1
        %v718 = vmax.f32 %v716, %v717
        %v719 = vsub.f32 %v655, %v718
        %v720 = vmul.f32 %v719, 1.442695
        %v721 = vpow.pop %v720
        %v722 = vpack.c.bf16 %v703, %v703
        %v723 = vpack.c.bf16 %v721, %v721
        %v724 = vpack.c.bf16 %v709, %v709
        %v726 = vsel %vm697, %v722, 0
        %vm728 = vcmask 1043456
        %v730 = vsel %vm728, %v723, 0
        %732 = vmatprep.subr.bf16.mxu0 0
        %733 = vmatpush1.bf16.msra.mxu0 %v730
        %734 = vmatprep.subr.bf16.mxu0 0
        %735 = vmatpush1.bf16.msra.mxu0 0
        %736 = vmatprep.subr.bf16.mxu0 0
        %737 = vmatpush1.bf16.msra.mxu0 0
        %738 = vmatprep.subr.bf16.mxu0 0
        %739 = vmatpush1.bf16.msra.mxu0 0
        %740 = vmatprep.subr.bf16.mxu0 0
        %741 = vmatpush1.bf16.msra.mxu0 0
        %742 = vmatprep.subr.bf16.mxu0 0
        %743 = vmatpush1.bf16.msra.mxu0 0
        %744 = vmatprep.subr.bf16.mxu0 0
        %745 = vmatpush1.bf16.msra.mxu0 0
        %746 = vmatprep.subr.bf16.mxu0 0
        %747 = vmatpush1.bf16.msra.mxu0 0
        %748 = vmatprep.subr.bf16.mxu0 0
        %749 = vmatpush1.bf16.msra.mxu0 0
        %750 = vmatprep.subr.bf16.mxu0 0
        %751 = vmatpush1.bf16.msra.mxu0 0
        %752 = vmatprep.subr.bf16.mxu0 0
        %753 = vmatpush1.bf16.msra.mxu0 0
        %754 = vmatprep.subr.bf16.mxu0 0
        %755 = vmatpush1.bf16.msra.mxu0 0
        %756 = vmatprep.subr.bf16.mxu0 0
        %757 = vmatpush1.bf16.msra.mxu0 0
        %758 = vmatprep.subr.bf16.mxu0 0
        %759 = vmatpush1.bf16.msra.mxu0 0
        %760 = vmatprep.subr.bf16.mxu0 0
        %761 = vmatpush1.bf16.msra.mxu0 0
        %762 = vmatprep.subr.bf16.mxu0 0
        %763 = vmatpush1.bf16.msra.mxu0 0
        %764 = vmatprep.mubr.bf16.mxu0 0
        %765 = vmatmul.mubr.bf16.gmra.mrb[0].mxu0 %v726
        %v766 = vpop.f32.mrb[0].mxu0
        %v767 = vadd.f32 0.0, %v766
        %v768 = vpop.f32.mrb[0].mxu0
        %v769 = vpop.f32.mrb[0].mxu0
        %v770 = vpop.f32.mrb[0].mxu0
        %771 = vdwg.mxu0
        %v773 = vsel %vm697, %v724, 0
        %v775 = vsel %vm697, %v723, 0
        %777 = vmatprep.subr.bf16.mxu0 0
        %778 = vmatpush1.bf16.xpose.msra.mxu0 %v775
        %779 = vmatprep.subr.bf16.mxu0 0
        %780 = vmatpush1.bf16.xpose.msra.mxu0 0
        %781 = vmatprep.subr.bf16.mxu0 0
        %782 = vmatpush1.bf16.xpose.msra.mxu0 0
        %783 = vmatprep.subr.bf16.mxu0 0
        %784 = vmatpush1.bf16.xpose.msra.mxu0 0
        %785 = vmatprep.subr.bf16.mxu0 0
        %786 = vmatpush1.bf16.xpose.msra.mxu0 0
        %787 = vmatprep.subr.bf16.mxu0 0
        %788 = vmatpush1.bf16.xpose.msra.mxu0 0
        %789 = vmatprep.subr.bf16.mxu0 0
        %790 = vmatpush1.bf16.xpose.msra.mxu0 0
        %791 = vmatprep.subr.bf16.mxu0 0
        %792 = vmatpush1.bf16.xpose.msra.mxu0 0
        %793 = vmatprep.subr.bf16.mxu0 0
        %794 = vmatpush1.bf16.xpose.msra.mxu0 0
        %795 = vmatprep.subr.bf16.mxu0 0
        %796 = vmatpush1.bf16.xpose.msra.mxu0 0
        %797 = vmatprep.subr.bf16.mxu0 0
        %798 = vmatpush1.bf16.xpose.msra.mxu0 0
        %799 = vmatprep.subr.bf16.mxu0 0
        %800 = vmatpush1.bf16.xpose.msra.mxu0 0
        %801 = vmatprep.subr.bf16.mxu0 0
        %802 = vmatpush1.bf16.xpose.msra.mxu0 0
        %803 = vmatprep.subr.bf16.mxu0 0
        %804 = vmatpush1.bf16.xpose.msra.mxu0 0
        %805 = vmatprep.subr.bf16.mxu0 0
        %806 = vmatpush1.bf16.xpose.msra.mxu0 0
        %807 = vmatprep.subr.bf16.mxu0 0
        %808 = vmatpush1.bf16.xpose.msra.mxu0 0
        %809 = vmatprep.mubr.bf16.mxu0 0
        %810 = vmatmul.mubr.bf16.gmra.mrb[0].mxu0 %v773
        %v811 = vpop.f32.mrb[0].mxu0
        %v812 = vadd.f32 0.0, %v811
        %v813 = vpop.f32.mrb[0].mxu0
        %v814 = vpop.f32.mrb[0].mxu0
        %v815 = vpop.f32.mrb[0].mxu0
        %816 = vdwg.mxu0
        %v817 = vmul.f32 %v703, %v812
        %v818 = vmul.f32 %v767, %v709
        %v819 = vsel %vm697, %v817, 0.0
        %820 = vadd.xlane.f32.xlu0 %v819
        %v821 = vpop.xlane.xlu0 %820
        %v822 = vrcp.pop %v821
        %v823 = vpack.c.bf16 %v817, %v817
        %v825 = vsel %vm697, %v823, 0
        %v828 = vsel %vm728, %v560, 0
        %830 = vmatprep.subr.bf16.mxu0 0
        %831 = vmatpush1.bf16.msra.mxu0 %v828
        %832 = vmatprep.subr.bf16.mxu0 0
        %833 = vmatpush1.bf16.msra.mxu0 0
        %834 = vmatprep.subr.bf16.mxu0 0
        %835 = vmatpush1.bf16.msra.mxu0 0
        %836 = vmatprep.subr.bf16.mxu0 0
        %837 = vmatpush1.bf16.msra.mxu0 0
        %838 = vmatprep.subr.bf16.mxu0 0
        %839 = vmatpush1.bf16.msra.mxu0 0
        %840 = vmatprep.subr.bf16.mxu0 0
        %841 = vmatpush1.bf16.msra.mxu0 0
        %842 = vmatprep.subr.bf16.mxu0 0
        %843 = vmatpush1.bf16.msra.mxu0 0
        %844 = vmatprep.subr.bf16.mxu0 0
        %845 = vmatpush1.bf16.msra.mxu0 0
        %846 = vmatprep.subr.bf16.mxu0 0
        %847 = vmatpush1.bf16.msra.mxu0 0
        %848 = vmatprep.subr.bf16.mxu0 0
        %849 = vmatpush1.bf16.msra.mxu0 0
        %850 = vmatprep.subr.bf16.mxu0 0
        %851 = vmatpush1.bf16.msra.mxu0 0
        %852 = vmatprep.subr.bf16.mxu0 0
        %853 = vmatpush1.bf16.msra.mxu0 0
        %854 = vmatprep.subr.bf16.mxu0 0
        %855 = vmatpush1.bf16.msra.mxu0 0
        %856 = vmatprep.subr.bf16.mxu0 0
        %857 = vmatpush1.bf16.msra.mxu0 0
        %858 = vmatprep.subr.bf16.mxu0 0
        %859 = vmatpush1.bf16.msra.mxu0 0
        %860 = vmatprep.subr.bf16.mxu0 0
        %861 = vmatpush1.bf16.msra.mxu0 0
        %862 = vmatprep.mubr.bf16.mxu0 0
        %863 = vmatmul.mubr.bf16.gmra.mrb[0].mxu0 %v825
        %v864 = vpop.f32.mrb[0].mxu0
        %v865 = vadd.f32 0.0, %v864
        %v866 = vpop.f32.mrb[0].mxu0
        %v867 = vpop.f32.mrb[0].mxu0
        %v868 = vpop.f32.mrb[0].mxu0
        %869 = vdwg.mxu0
        %v870 = vmul.f32 %v865, %v822
        %v871 = vpack.c.bf16 %v870, %v870
        %v872 = vpack.c.bf16 %v818, %v818
        %v874 = vsel %vm697, %v872, 0
        %v877 = vsel %vm728, %v564, 0
        %879 = vmatprep.subr.bf16.mxu0 0
        %880 = vmatpush1.bf16.msra.mxu0 %v877
        %881 = vmatprep.subr.bf16.mxu0 0
        %882 = vmatpush1.bf16.msra.mxu0 0
        %883 = vmatprep.subr.bf16.mxu0 0
        %884 = vmatpush1.bf16.msra.mxu0 0
        %885 = vmatprep.subr.bf16.mxu0 0
        %886 = vmatpush1.bf16.msra.mxu0 0
        %887 = vmatprep.subr.bf16.mxu0 0
        %888 = vmatpush1.bf16.msra.mxu0 0
        %889 = vmatprep.subr.bf16.mxu0 0
        %890 = vmatpush1.bf16.msra.mxu0 0
        %891 = vmatprep.subr.bf16.mxu0 0
        %892 = vmatpush1.bf16.msra.mxu0 0
        %893 = vmatprep.subr.bf16.mxu0 0
        %894 = vmatpush1.bf16.msra.mxu0 0
        %895 = vmatprep.subr.bf16.mxu0 0
        %896 = vmatpush1.bf16.msra.mxu0 0
        %897 = vmatprep.subr.bf16.mxu0 0
        %898 = vmatpush1.bf16.msra.mxu0 0
        %899 = vmatprep.subr.bf16.mxu0 0
        %900 = vmatpush1.bf16.msra.mxu0 0
        %901 = vmatprep.subr.bf16.mxu0 0
        %902 = vmatpush1.bf16.msra.mxu0 0
        %903 = vmatprep.subr.bf16.mxu0 0
        %904 = vmatpush1.bf16.msra.mxu0 0
        %905 = vmatprep.subr.bf16.mxu0 0
        %906 = vmatpush1.bf16.msra.mxu0 0
        %907 = vmatprep.subr.bf16.mxu0 0
        %908 = vmatpush1.bf16.msra.mxu0 0
        %909 = vmatprep.subr.bf16.mxu0 0
        %910 = vmatpush1.bf16.msra.mxu0 0
        %911 = vmatprep.mubr.bf16.mxu0 0
        %912 = vmatmul.mubr.bf16.gmra.mrb[0].mxu0 %v874
        %v913 = vpop.f32.mrb[0].mxu0
        %v914 = vadd.f32 0.0, %v913
        %v915 = vpop.f32.mrb[0].mxu0
        %v916 = vpop.f32.mrb[0].mxu0
        %v917 = vpop.f32.mrb[0].mxu0
        %918 = vdwg.mxu0
        %v919 = vmul.f32 %v914, %v822
        %v920 = vpack.c.bf16 %v919, %v919
        %921 = vst.msk [vmem:[#allocation3] sm:$0xf] %vm306, %v871
        %s922 = smul.addr %s549, 4
        %s923 = scalar_lea.vmem [#allocation3], %s922
        %924 = vst.msk [vmem:[%s923] sm:$0xf] %vm306, %v920
        %v925 = vld [vmem:[#allocation3] sm:$0xf]
        %v926 = vld [vmem:[#allocation9] sm:$0xf]
        %v927 = vld [vmem:[#allocation9 + $0x4] sm:$0xf]
        %v928 = vld [vmem:[#allocation9 + $0x8] sm:$0xf]
        %v929 = vld [vmem:[#allocation9 + $0xc] sm:$0xf]
        %s930 = scalar_lea.vmem [#allocation3], 4
        %v931 = vld [vmem:[%s930] sm:$0xf]
        %s932 = scalar_lea.vmem [#allocation9], 16
        %v933 = vld [vmem:[%s932] sm:$0xf]
        %v934 = vld [vmem:[%s932 + $0x4] sm:$0xf]
        %v935 = vld [vmem:[%s932 + $0x8] sm:$0xf]
        %v936 = vld [vmem:[%s932 + $0xc] sm:$0xf]
        %v941 = vunpack.c.l.b16 %v933
        %v942 = vunpack.c.l.b16 %v934
        %v943 = vunpack.c.l.b16 %v935
        %v944 = vunpack.c.l.b16 %v936
        %v945 = vpack.c.b16 %v942, %v941
        %v946 = vpack.c.b16 %v944, %v943
        %v950 = vsel %vm261, %v931, 0
        %952 = vmatprep.subr.bf16.mxu0 0
        %953 = vmatpush1.bf16.msra.mxu0 %v945
        %954 = vmatprep.subr.bf16.mxu0 0
        %955 = vmatpush1.bf16.msra.mxu0 %v946
        %956 = vmatprep.subr.bf16.mxu0 0
        %957 = vmatpush1.bf16.msra.mxu0 0
        %958 = vmatprep.subr.bf16.mxu0 0
        %959 = vmatpush1.bf16.msra.mxu0 0
        %960 = vmatprep.subr.bf16.mxu0 0
        %961 = vmatpush1.bf16.msra.mxu0 0
        %962 = vmatprep.subr.bf16.mxu0 0
        %963 = vmatpush1.bf16.msra.mxu0 0
        %964 = vmatprep.subr.bf16.mxu0 0
        %965 = vmatpush1.bf16.msra.mxu0 0
        %966 = vmatprep.subr.bf16.mxu0 0
        %967 = vmatpush1.bf16.msra.mxu0 0
        %968 = vmatprep.subr.bf16.mxu0 0
        %969 = vmatpush1.bf16.msra.mxu0 0
        %970 = vmatprep.subr.bf16.mxu0 0
        %971 = vmatpush1.bf16.msra.mxu0 0
        %972 = vmatprep.subr.bf16.mxu0 0
        %973 = vmatpush1.bf16.msra.mxu0 0
        %974 = vmatprep.subr.bf16.mxu0 0
        %975 = vmatpush1.bf16.msra.mxu0 0
        %976 = vmatprep.subr.bf16.mxu0 0
        %977 = vmatpush1.bf16.msra.mxu0 0
        %978 = vmatprep.subr.bf16.mxu0 0
        %979 = vmatpush1.bf16.msra.mxu0 0
        %980 = vmatprep.subr.bf16.mxu0 0
        %981 = vmatpush1.bf16.msra.mxu0 0
        %982 = vmatprep.subr.bf16.mxu0 0
        %983 = vmatpush1.bf16.msra.mxu0 0
        %984 = vmatprep.mubr.bf16.mxu0 0
        %985 = vmatmul.mubr.bf16.gmra.mrb[0].mxu0 %v950
        %v986 = vpop.f32.mrb[0].mxu0
        %v987 = vadd.f32 0.0, %v986
        %v988 = vpop.f32.mrb[0].mxu0
        %v989 = vpop.f32.mrb[0].mxu0
        %v990 = vpop.f32.mrb[0].mxu0
        %991 = vdwg.mxu0
        %v996 = vunpack.c.l.b16 %v926
        %v997 = vunpack.c.l.b16 %v927
        %v998 = vunpack.c.l.b16 %v928
        %v999 = vunpack.c.l.b16 %v929
        %v1000 = vpack.c.b16 %v997, %v996
        %v1001 = vpack.c.b16 %v999, %v998
        %v1005 = vsel %vm261, %v925, 0
        %1007 = vmatprep.subr.bf16.mxu0 0
        %1008 = vmatpush1.bf16.msra.mxu0 %v1000
        %1009 = vmatprep.subr.bf16.mxu0 0
        %1010 = vmatpush1.bf16.msra.mxu0 %v1001
        %1011 = vmatprep.subr.bf16.mxu0 0
        %1012 = vmatpush1.bf16.msra.mxu0 0
        %1013 = vmatprep.subr.bf16.mxu0 0
        %1014 = vmatpush1.bf16.msra.mxu0 0
        %1015 = vmatprep.subr.bf16.mxu0 0
        %1016 = vmatpush1.bf16.msra.mxu0 0
        %1017 = vmatprep.subr.bf16.mxu0 0
        %1018 = vmatpush1.bf16.msra.mxu0 0
        %1019 = vmatprep.subr.bf16.mxu0 0
        %1020 = vmatpush1.bf16.msra.mxu0 0
        %1021 = vmatprep.subr.bf16.mxu0 0
        %1022 = vmatpush1.bf16.msra.mxu0 0
        %1023 = vmatprep.subr.bf16.mxu0 0
        %1024 = vmatpush1.bf16.msra.mxu0 0
        %1025 = vmatprep.subr.bf16.mxu0 0
        %1026 = vmatpush1.bf16.msra.mxu0 0
        %1027 = vmatprep.subr.bf16.mxu0 0
        %1028 = vmatpush1.bf16.msra.mxu0 0
        %1029 = vmatprep.subr.bf16.mxu0 0
        %1030 = vmatpush1.bf16.msra.mxu0 0
        %1031 = vmatprep.subr.bf16.mxu0 0
        %1032 = vmatpush1.bf16.msra.mxu0 0
        %1033 = vmatprep.subr.bf16.mxu0 0
        %1034 = vmatpush1.bf16.msra.mxu0 0
        %1035 = vmatprep.subr.bf16.mxu0 0
        %1036 = vmatpush1.bf16.msra.mxu0 0
        %1037 = vmatprep.subr.bf16.mxu0 0
        %1038 = vmatpush1.bf16.msra.mxu0 0
        %1039 = vmatprep.mubr.bf16.mxu0 0
        %1040 = vmatmul.mubr.bf16.gmra.mrb[0].mxu0 %v1005
        %v1041 = vpop.f32.mrb[0].mxu0
        %v1042 = vadd.f32 %v987, %v1041
        %v1043 = vpop.f32.mrb[0].mxu0
        %v1044 = vpop.f32.mrb[0].mxu0
        %v1045 = vpop.f32.mrb[0].mxu0
        %1046 = vdwg.mxu0
        %v1047 = vld [vmem:[%s3] sm:$0x1]
        %v1049 = vlaneseq
        %v1050 = vshrl.u32 %v1049, 7
        %v1051 = vsub.s32 0, %v1050
        %v1052 = vrot.slane %v1047, %v1051
        %v1054 = vadd.f32 %v1042, %v1052
        %1055 = vst.msk [vmem:[%s241] sm:$0xff] %vm261, %v1054
        %s1056 = sand.u32 %s119, 1
        %s1057 = scalar_lea.sflag [#allocation6], %s1056
        %s1058 = sand.u32 %s119, 1
        %s1059 = smul.addr %s1058, 8
        %s1060 = scalar_lea.vmem [#allocation10], %s1059
        // Predicated region
        $region49: #{tpu_custom_call.1} parent=35 // pred_check
          %p1061 = pneg %p129
        $region50: #{tpu_custom_call.1} parent=35 // pred_check_branch
          %1063 = sbr.rel (%p1061) target = $region52
        $region51: #{tpu_custom_call.1} parent=35 // pred_region
          %s1065 = ssub.s32 128, 128
          %1066 = vsyncadd %s1057, %s1065
          %s1067 = smul.addr %s22, 128
          %s1068 = scalar_lea.hbm %s4, %s1067
          %s1070 = sshll.u32 %s1060, 4
          %s1071 = int_to_ptr.vmem [resolvable:$true] %s1070
          %1073 = dma.vmem_to_hbm [thread:$0]  %s1071, 128, %s1068, %s1057
        $region52: #{tpu_custom_call.1} parent=35 // pred_fallthru
          _
      $region36: #{tpu_custom_call.1} parent=5 // pred_fallthru
        _
      %p1074 = scmp.le.s32.totalorder 2, %s17
      // Predicated region
      $region53: #{tpu_custom_call.1} parent=5 // pred_check
        %p1075 = pneg %p1074
      $region54: #{tpu_custom_call.1} parent=5 // pred_check_branch
        %1077 = sbr.rel (%p1075) target = $region56
      $region55: #{tpu_custom_call.1} parent=5 // pred_region
        %s1078 = ssub.s32 %s17, 2
        // Predicated region
        $region57: #{tpu_custom_call.1} parent=55 // pred_check
          %p1079 = pneg %p135
        $region58: #{tpu_custom_call.1} parent=55 // pred_check_branch
          %1081 = sbr.rel (%p1079) target = $region60
        $region59: #{tpu_custom_call.1} parent=55 // pred_region
          %s1082 = sand.u32 %s120, 1
          %s1083 = scalar_lea.sflag [#allocation6], %s1082
          %s1084 = sand.u32 %s120, 1
          %s1085 = smul.addr %s1084, 8
          %s1086 = scalar_lea.vmem [#allocation10], %s1085
          %1087 = dma.done %s1083, 128
        $region60: #{tpu_custom_call.1} parent=55 // pred_fallthru
          _
      $region56: #{tpu_custom_call.1} parent=5 // pred_fallthru
        _
    $region6: #{tpu_custom_call.1} parent=1 // loop_footer
      %s21 = sadd.s32 1, %s17
    $region7: #{tpu_custom_call.1} parent=1 // loop_footer_branch
      %16 = sbr.rel target = $region3
    $region8: #{tpu_custom_call.1} parent=1 // loop_exit
      _
    %1088 = vsyncpa [#allocation5], 1
    %s1089 = scalar_lea.sflag [#allocation5], 1
    %1090 = vsyncpa %s1089, 1
    %1091 = vsyncpa [#allocation8], 1
    %1092 = vsyncpa [#allocation6], 1
    %s1093 = scalar_lea.sflag [#allocation6], 1
    %1094 = vsyncpa %s1093, 1

</llo_original>
